<compile_context>
chip_gen: v5e
topology: v5e:2x2
jax: 0.10.0
libtpu: 0.0.40
codegen_flags: <defaults>
</compile_context>

<pallas_src>
import numpy as np
import jax
import jax.numpy as jnp
from jax.experimental import pallas as pl
from jax.experimental.pallas import tpu as pltpu

# Constants implied by the PyTorch __init__
ZDIM = 2                  # CausalConv1d(2, 2, ...) -> downsampled z has 2 channels
STRIDE = 2 * 4 * 5 * 8    # 320
KSIZE = STRIDE * 2        # 640


def _round_up(x, m):
    return (x + m - 1) // m * m


def _vmem_limit(per_step_bytes):
    # ~2x the double-buffered working set, floored at 8 MiB (headroom for
    # Mosaic internal scratch) and capped well under v7x's 64 MiB physical.
    need = 2 * per_step_bytes                      # double-buffered
    return int(min(max(2 * need, 8 * 1024 * 1024), 48 * 1024 * 1024))


# ---------------------------------------------------------------------------
# Pass 1: causal strided conv (the CausalConv1d downsample).
# ---------------------------------------------------------------------------
def _downsample_kernel(f_ref, w_ref, p_ref):
    """One (batch, frame-tile) block.

    f_ref : (1, 2, FT, 320) bf16  non-overlapping 320-sample frames of padded z
    w_ref : (2, 320, 8)     bf16  cols 0:2 = taps [0,320) (A), cols 2:4 = taps [320,640) (B)
    p_ref : (1, FT, 8)      f32   per-frame partial products (A | B)
    """
    p = jnp.dot(f_ref[0, 0], w_ref[0], preferred_element_type=jnp.float32)
    p = p + jnp.dot(f_ref[0, 1], w_ref[1], preferred_element_type=jnp.float32)
    p_ref[0] = p


def causal_downsample(z, conv_w, *, frame_tile=None):
    """CausalConv1d(2,2,KSIZE,STRIDE) WITHOUT bias: z (B,2,Tz) -> zds (B,2,Tx)."""
    B, zc, Tz = z.shape
    assert zc == ZDIM
    Tx = (Tz - 1) // STRIDE + 1
    n_frames = Tx + 1                      # output t uses frames t and t+1

    if frame_tile is None:
        frame_tile = min(512, _round_up(n_frames, 128))
    FT = frame_tile
    nf_pad = _round_up(n_frames, FT)
    target_len = nf_pad * STRIDE

    # Single bf16 framed copy of the causally padded z (reshape only, no
    # transpose pass, no overlapping slices).
    # TODO(synk): the padded copy itself could be avoided with a pl.ANY ref +
    # manual boundary-aware DMA, at the cost of extra kernel complexity.
    zp_len = Tz + (KSIZE - 1)
    pad_right = max(0, target_len - zp_len)
    zp = jnp.pad(z.astype(jnp.bfloat16), ((0, 0), (0, 0), (KSIZE - 1, pad_right)))
    zp = zp[:, :, :target_len]
    frames = zp.reshape(B, ZDIM, nf_pad, STRIDE)          # (B, 2, nF, 320)

    # Weight pack: w_pack[c, j, o]   = conv_w[o, c, j]        (A half)
    #              w_pack[c, j, o+2] = conv_w[o, c, 320 + j]  (B half)
    wc = conv_w.astype(jnp.float32)
    w_pack = jnp.zeros((ZDIM, STRIDE, 8), jnp.float32)
    w_pack = w_pack.at[:, :, 0:ZDIM].set(jnp.transpose(wc[:, :, :STRIDE], (1, 2, 0)))
    w_pack = w_pack.at[:, :, ZDIM:2 * ZDIM].set(jnp.transpose(wc[:, :, STRIDE:], (1, 2, 0)))
    w_pack = w_pack.astype(jnp.bfloat16)

    per_step = (ZDIM * FT * STRIDE * 2        # frames tile (bf16)
                + ZDIM * STRIDE * 8 * 2       # weights
                + FT * 8 * 4)                 # output tile
    grid = (B, nf_pad // FT)

    p = pl.pallas_call(
        _downsample_kernel,
        out_shape=jax.ShapeDtypeStruct((B, nf_pad, 8), jnp.float32),
        grid=grid,
        in_specs=[
            pl.BlockSpec((1, ZDIM, FT, STRIDE), lambda b, j: (b, 0, j, 0)),
            pl.BlockSpec((ZDIM, STRIDE, 8), lambda b, j: (0, 0, 0)),
        ],
        out_specs=pl.BlockSpec((1, FT, 8), lambda b, j: (b, j, 0)),
        compiler_params=pltpu.CompilerParams(
            dimension_semantics=("parallel", "parallel"),
            vmem_limit_bytes=_vmem_limit(per_step)),
    )(frames, w_pack)

    # Tiny cross-frame combine on (B, nF, 8):  zds[:, o, t] = A[t, o] + B[t+1, o]
    pa = p[:, :Tx, 0:ZDIM]
    pb = p[:, 1:Tx + 1, ZDIM:2 * ZDIM]
    return jnp.transpose(pa + pb, (0, 2, 1))               # (B, 2, Tx), no bias


# ---------------------------------------------------------------------------
# Pass 2: FiLM modulation (gamma/beta Linear + gamma*x + beta).
# ---------------------------------------------------------------------------
def _film_kernel(zds_ref, wg_ref, bg_ref, wb_ref, bb_ref, x_ref, o_ref):
    """One (batch, time-tile) block.

    zds_ref : (1, 2, Tt) f32   downsampled conditioning (bias folded into bg/bb)
    wg_ref  : (C, 2) f32, bg_ref : (C, 1) f32   gamma Linear (+ folded conv bias)
    wb_ref  : (C, 2) f32, bb_ref : (C, 1) f32   beta  Linear (+ folded conv bias)
    x_ref / o_ref : (1, C, Tt)  input / output slab (time on lanes)
    """
    zd = zds_ref[0]                                     # (2, Tt)
    z0 = zd[0:1, :]
    z1 = zd[1:2, :]
    wg = wg_ref[...]                                    # (C, 2)
    wb = wb_ref[...]
    # K=2 contraction as VPU broadcast FMAs (never touches the MXU).
    gamma = wg[:, 0:1] * z0 + wg[:, 1:2] * z1 + bg_ref[...]     # (C, Tt)
    beta = wb[:, 0:1] * z0 + wb[:, 1:2] * z1 + bb_ref[...]      # (C, Tt)

    xv = x_ref[0].astype(jnp.float32)
    o_ref[0] = (gamma * xv + beta).astype(o_ref.dtype)


def film_forward(x, z, params, *, time_tile=None):
    B, C, Tx = x.shape
    Bz, zc, Tz = z.shape
    assert Bz == B and zc == ZDIM
    assert (Tz - 1) // STRIDE + 1 == Tx, "downsampled z length must equal Tx"

    # Pass 1: strided causal conv on its own (bf16 frames, read once).
    zds = causal_downsample(z, params["conv_w"])        # (B, 2, Tx) f32, no bias

    # Time tile: as large as divides Tx (per-step overhead / HBM efficiency),
    # up to 2048 lanes.  Require a 128-multiple so stores stay lane-dense.
    if time_tile is None:
        cands = [t for t in (2048, 1024, 512, 256, 128) if Tx % t == 0]
        if not cands:
            raise ValueError("Tx must be a multiple of 128 (pad x/z upstream).")
        time_tile = cands[0]
    Tt = time_tile
    assert Tx % Tt == 0 and Tt % 128 == 0

    f32 = jnp.float32
    wg = params["gamma_w"].astype(f32)                  # (C, 2)
    wbeta = params["beta_w"].astype(f32)                # (C, 2)
    bconv = params["conv_b"].astype(f32)                # (2,)
    # Fold the conv bias into the gamma/beta biases: g = Wg(zraw + bc) + bg.
    bg_eff = (params["gamma_b"].astype(f32) + wg @ bconv).reshape(C, 1)
    bb_eff = (params["beta_b"].astype(f32) + wbeta @ bconv).reshape(C, 1)

    xbytes = jnp.dtype(x.dtype).itemsize
    per_step = (ZDIM * Tt * 4                     # zds tile
                + 2 * C * Tt * xbytes             # x + out tiles
                + 2 * (C * ZDIM + C) * 4)         # weights/biases

    grid = (B, Tx // Tt)
    return pl.pallas_call(
        _film_kernel,
        out_shape=jax.ShapeDtypeStruct((B, C, Tx), x.dtype),
        grid=grid,
        in_specs=[
            pl.BlockSpec((1, ZDIM, Tt), lambda b, j: (b, 0, j)),   # zds
            pl.BlockSpec((C, ZDIM), lambda b, j: (0, 0)),          # gamma W
            pl.BlockSpec((C, 1), lambda b, j: (0, 0)),             # gamma b (+conv b)
            pl.BlockSpec((C, ZDIM), lambda b, j: (0, 0)),          # beta W
            pl.BlockSpec((C, 1), lambda b, j: (0, 0)),             # beta b (+conv b)
            pl.BlockSpec((1, C, Tt), lambda b, j: (b, 0, j)),      # x
        ],
        out_specs=pl.BlockSpec((1, C, Tt), lambda b, j: (b, 0, j)),
        compiler_params=pltpu.CompilerParams(
            dimension_semantics=("parallel", "parallel"),
            vmem_limit_bytes=_vmem_limit(per_step)),
    )(zds, wg, bg_eff, wbeta, bb_eff, x)


def film_reference(x, z, params):
    """Pure-JAX reference mirroring the PyTorch forward exactly."""
    B, C, Tx = x.shape
    hi = jax.lax.Precision.HIGHEST
    zds = jax.lax.conv_general_dilated(
        z, params["conv_w"], window_strides=(STRIDE,),
        padding=[(KSIZE - 1, 0)],
        dimension_numbers=("NCH", "OIH", "NCH"), precision=hi)
    zds = zds + params["conv_b"][None, :, None]                 # (B, 2, Tx)
    zt = jnp.transpose(zds, (0, 2, 1)).reshape(-1, ZDIM)        # (B*Tx, 2)
    gamma = jnp.einsum("nk,ck->nc", zt, params["gamma_w"], precision=hi) \
        + params["gamma_b"]
    beta = jnp.einsum("nk,ck->nc", zt, params["beta_w"], precision=hi) \
        + params["beta_b"]
    gamma = gamma.reshape(B, Tx, C).transpose(0, 2, 1)
    beta = beta.reshape(B, Tx, C).transpose(0, 2, 1)
    return gamma * x.astype(jnp.float32) + beta


if __name__ == "__main__":
    key = jax.random.PRNGKey(0)
    B, C, Tx = 2, 16, 256        # batch, maskdim (channels of x), downsampled time
    Tz = Tx * STRIDE             # 81920 raw conditioning samples

    ks = jax.random.split(key, 8)
    x = jax.random.normal(ks[0], (B, C, Tx), jnp.float32)
    # Keep z / conv_w exactly bf16-representable so the bf16 MXU conv and the
    # f32 HIGHEST-precision reference agree to f32 rounding.
    z = jax.random.normal(ks[1], (B, ZDIM, Tz), jnp.float32)
    z = z.astype(jnp.bfloat16).astype(jnp.float32)

    params = {
        "conv_w": (0.05 * jax.random.normal(ks[2], (ZDIM, ZDIM, KSIZE), jnp.float32)
                   ).astype(jnp.bfloat16).astype(jnp.float32),
        "conv_b": 0.05 * jax.random.normal(ks[3], (ZDIM,), jnp.float32),
        "gamma_w": jax.random.normal(ks[4], (C, ZDIM), jnp.float32) / jnp.sqrt(ZDIM),
        "gamma_b": jax.random.normal(ks[5], (C,), jnp.float32),
        "beta_w": jax.random.normal(ks[6], (C, ZDIM), jnp.float32) / jnp.sqrt(ZDIM),
        "beta_b": jax.random.normal(ks[7], (C,), jnp.float32),
    }

    # float32 path
    out = film_forward(x, z, params)
    jax.block_until_ready(out)
    ref = film_reference(x, z, params)
    np.testing.assert_allclose(np.asarray(out), np.asarray(ref),
                               rtol=1e-4, atol=1e-4)

    # bf16 x/out path: halves x+out HBM traffic, compute stays f32 in-kernel.
    xb = x.astype(jnp.bfloat16)
    out_b = film_forward(xb, z, params)
    jax.block_until_ready(out_b)
    ref_b = film_reference(xb.astype(jnp.float32), z, params)
    np.testing.assert_allclose(np.asarray(out_b.astype(jnp.float32)),
                               np.asarray(ref_b), rtol=1e-2, atol=1e-2)

    print("KERNEL_OK")
</pallas_src>

<mosaic_0001>
module attributes {stable_mosaic.version = 11 : i64} {
  func.func @_downsample_kernel(%arg0: i32, %arg1: i32, %arg2: memref<1x2x384x320xbf16, #tpu.memory_space<vmem>>, %arg3: memref<2x320x8xbf16, #tpu.memory_space<vmem>>, %arg4: memref<1x384x8xf32, #tpu.memory_space<vmem>>) attributes {dimension_semantics = [#tpu.dimension_semantics<parallel>, #tpu.dimension_semantics<parallel>], iteration_bounds = array<i64: 2, 1>, scalar_prefetch = 0 : i64, scratch_operands = 0 : i64, tpu.core_type = #tpu.core_type<tc>, window_params = [{transform_indices = @transform_0, window_bounds = array<i64: 1, 2, 384, 320>}, {pipeline_mode = #tpu.pipeline_mode<synchronous>, transform_indices = @transform_1, window_bounds = array<i64: 2, 320, 8>}, {transform_indices = @transform_2, window_bounds = array<i64: 1, 384, 8>}]} {
    %c0 = arith.constant 0 : index
    %c0_0 = arith.constant 0 : index
    %c0_1 = arith.constant 0 : index
    %c0_2 = arith.constant 0 : index
    %0 = vector.load %arg2[%c0, %c0_0, %c0_1, %c0_2] : memref<1x2x384x320xbf16, #tpu.memory_space<vmem>>, vector<1x1x384x320xbf16>
    %1 = vector.shape_cast %0 : vector<1x1x384x320xbf16> to vector<384x320xbf16>
    %c0_3 = arith.constant 0 : index
    %c0_4 = arith.constant 0 : index
    %c0_5 = arith.constant 0 : index
    %2 = vector.load %arg3[%c0_3, %c0_4, %c0_5] : memref<2x320x8xbf16, #tpu.memory_space<vmem>>, vector<1x320x8xbf16>
    %3 = vector.shape_cast %2 : vector<1x320x8xbf16> to vector<320x8xbf16>
    %cst = arith.constant dense<0.000000e+00> : vector<384x8xf32>
    %4 = tpu.matmul %1, %3, %cst {dimension_numbers = #tpu.dot_dimension_numbers<[1], [0], [0], [1], [0, 0, 1, 1], [], []>} : vector<384x320xbf16>, vector<320x8xbf16>, vector<384x8xf32> -> vector<384x8xf32>
    %c0_6 = arith.constant 0 : index
    %c1 = arith.constant 1 : index
    %c0_7 = arith.constant 0 : index
    %c0_8 = arith.constant 0 : index
    %5 = vector.load %arg2[%c0_6, %c1, %c0_7, %c0_8] : memref<1x2x384x320xbf16, #tpu.memory_space<vmem>>, vector<1x1x384x320xbf16>
    %6 = vector.shape_cast %5 : vector<1x1x384x320xbf16> to vector<384x320xbf16>
    %c1_9 = arith.constant 1 : index
    %c0_10 = arith.constant 0 : index
    %c0_11 = arith.constant 0 : index
    %7 = vector.load %arg3[%c1_9, %c0_10, %c0_11] : memref<2x320x8xbf16, #tpu.memory_space<vmem>>, vector<1x320x8xbf16>
    %8 = vector.shape_cast %7 : vector<1x320x8xbf16> to vector<320x8xbf16>
    %cst_12 = arith.constant dense<0.000000e+00> : vector<384x8xf32>
    %9 = tpu.matmul %6, %8, %cst_12 {dimension_numbers = #tpu.dot_dimension_numbers<[1], [0], [0], [1], [0, 0, 1, 1], [], []>} : vector<384x320xbf16>, vector<320x8xbf16>, vector<384x8xf32> -> vector<384x8xf32>
    %10 = arith.addf %4, %9 : vector<384x8xf32>
    %c0_13 = arith.constant 0 : index
    %c0_14 = arith.constant 0 : index
    %c0_15 = arith.constant 0 : index
    %11 = vector.load %arg4[%c0_13, %c0_14, %c0_15] : memref<1x384x8xf32, #tpu.memory_space<vmem>>, vector<1x384x8xf32>
    %12 = vector.shape_cast %11 : vector<1x384x8xf32> to vector<384x8xf32>
    %13 = vector.shape_cast %10 : vector<384x8xf32> to vector<1x384x8xf32>
    tpu.vector_store %arg4[%c0_13, %c0_14, %c0_15], %13 {strides = array<i32>} : memref<1x384x8xf32, #tpu.memory_space<vmem>>, vector<1x384x8xf32>,
    return
  }
  func.func @transform_0(%arg0: i32, %arg1: i32) -> (i32, i32, i32, i32) {
    %c0_i32 = arith.constant 0 : i32
    %c0_i32_0 = arith.constant 0 : i32
    %c0_i32_1 = arith.constant 0 : i32
    return %arg0, %c0_i32, %arg1, %c0_i32_0 : i32, i32, i32, i32
  }
  func.func @transform_1(%arg0: i32, %arg1: i32) -> (i32, i32, i32) {
    %c0_i32 = arith.constant 0 : i32
    %c0_i32_0 = arith.constant 0 : i32
    %c0_i32_1 = arith.constant 0 : i32
    %c0_i32_2 = arith.constant 0 : i32
    return %c0_i32, %c0_i32_0, %c0_i32_1 : i32, i32, i32
  }
  func.func @transform_2(%arg0: i32, %arg1: i32) -> (i32, i32, i32) {
    %c0_i32 = arith.constant 0 : i32
    %c0_i32_0 = arith.constant 0 : i32
    return %arg0, %arg1, %c0_i32 : i32, i32, i32
  }
}

</mosaic_0001>

<llo_original>
// kernel: tpu_custom_call.1
$region0: #{tpu_custom_call.1}
  #allocation0 [shape = 'u32[]', space=smem, size = 0x4, offset = 0x4, fixed_abs, tag = 'smem constant byte address 0x4 - core index']
  #allocation1 [shape = 'u32[72,128]{1,0:T(1,128)}', space=vmem, size = 0x9000, scoped, tag = 'internal scratch']
  %s0 = inlined_call_operand.vmem [shape: bf16[2,2,384,320], index: 0, kind: input, shape index: {}]
  %s1 = inlined_call_operand.vmem [shape: bf16[2,320,8], index: 1, kind: input, shape index: {}]
  %s2 = inlined_call_operand.vmem [shape: f32[2,384,8], index: 2, kind: output, shape index: {}]
  %s3 = sld [smem:[#allocation0]]
  $region41: #{tpu_custom_call.1} parent=0
    _
  %s5 = ssub.s32 1, %s3
  %s6 = scalar_select 0, %s5, %s3
  loop: start=0, step=1, limit=4
  $region2: #{tpu_custom_call.1} parent=0 // loop_pre_header
    _
  $region3: #{tpu_custom_call.1} parent=0 // loop_header
    %s8 = sphi 0, %s12
    %p9 = scmp.ge.s32.totalorder %s8, 4
    %s15 = sphi 0, %s27
    %s16 = sphi 0, %s23
    %s17 = sphi 0, %s15
    %s18 = sphi 0, %s16
    %s19 = sphi 0, %s17
    %s20 = sphi 0, %s18
    %s32 = sphi 0, %s34
    %s35 = sphi 0, %s32
    %s36 = sphi 0, %s35
    %s52 = sphi 0, %s36
    %s56 = sphi 0, %s56
    %s58 = sphi 0, %s56
    %s59 = sphi 0, %s58
    %s73 = sphi 0, %s59
    %s81 = sphi 0, %s83
    %s84 = sphi 0, %s81
    %s85 = sphi 0, %s84
    %s101 = sphi 0, %s85
  $region4: #{tpu_custom_call.1} parent=0 // loop_header_branch
    %11 = sbr.rel (%p9) target = $region8
  $region5: #{tpu_custom_call.1} parent=0 // loop_body
    %s13 = ssub.s32 %s8, 1
    %s14 = ssub.s32 %s8, 2
    %s21 = sadd.s32 1, %s16
    %p22 = scmp.ge.s32.totalorder %s21, 1
    %s23 = scalar_select %p22, 0, %s21
    %s24 = sadd.s32 1, %s15
    %s25 = scalar_select %p22, %s24, %s15
    %p26 = scmp.ge.s32.totalorder %s25, 2
    %s27 = scalar_select %p26, 0, %s25
    %s28 = ssub.s32 %s15, %s27
    %s29 = ssub.s32 %s16, %s23
    %s30 = sor.u32 %s28, %s29
    %p31 = scmp.eq.s32.totalorder %s30, 0
    %s33 = sadd.s32 %s32, 1
    %s34 = scalar_select %p31, %s32, %s33
    %p37 = pneg %p31
    %p38 = scmp.eq.s32.totalorder %s8, 1
    %p39 = por %p37, %p38
    %p40 = scmp.ne.s32.totalorder %s32, %s35
    %p41 = scmp.eq.s32.totalorder %s8, 0
    %p42 = por %p40, %p41
    %p43 = scmp.ne.s32.totalorder %s32, %s35
    %p44 = scmp.eq.s32.totalorder %s13, 1
    %p45 = por %p43, %p44
    %p46 = scmp.ne.s32.totalorder %s35, %s36
    %p47 = scmp.eq.s32.totalorder %s13, 0
    %p48 = por %p46, %p47
    %p49 = scmp.ne.s32.totalorder %s35, %s36
    %p50 = scmp.eq.s32.totalorder %s14, 1
    %p51 = por %p49, %p50
    %p53 = scmp.ne.s32.totalorder %s36, %s52
    %p54 = scmp.eq.s32.totalorder %s14, 0
    %p55 = por %p53, %p54
    %s57 = sadd.s32 %s56, 1
    %p60 = scmp.eq.s32.totalorder %s8, 1
    %p61 = scmp.ne.s32.totalorder %s56, %s58
    %p62 = scmp.eq.s32.totalorder %s8, 0
    %p63 = por %p61, %p62
    %p64 = scmp.ne.s32.totalorder %s56, %s58
    %p65 = scmp.eq.s32.totalorder %s13, 1
    %p66 = por %p64, %p65
    %p67 = scmp.ne.s32.totalorder %s58, %s59
    %p68 = scmp.eq.s32.totalorder %s13, 0
    %p69 = por %p67, %p68
    %p70 = scmp.ne.s32.totalorder %s58, %s59
    %p71 = scmp.eq.s32.totalorder %s14, 1
    %p72 = por %p70, %p71
    %p74 = scmp.ne.s32.totalorder %s59, %s73
    %p75 = scmp.eq.s32.totalorder %s14, 0
    %p76 = por %p74, %p75
    %s77 = ssub.s32 %s15, %s27
    %s78 = ssub.s32 %s16, %s23
    %s79 = sor.u32 %s77, %s78
    %p80 = scmp.eq.s32.totalorder %s79, 0
    %s82 = sadd.s32 %s81, 1
    %s83 = scalar_select %p80, %s81, %s82
    %p86 = pneg %p80
    %p87 = scmp.eq.s32.totalorder %s8, 1
    %p88 = por %p86, %p87
    %p89 = scmp.ne.s32.totalorder %s81, %s84
    %p90 = scmp.eq.s32.totalorder %s8, 0
    %p91 = por %p89, %p90
    %p92 = scmp.ne.s32.totalorder %s81, %s84
    %p93 = scmp.eq.s32.totalorder %s13, 1
    %p94 = por %p92, %p93
    %p95 = scmp.ne.s32.totalorder %s84, %s85
    %p96 = scmp.eq.s32.totalorder %s13, 0
    %p97 = por %p95, %p96
    %p98 = scmp.ne.s32.totalorder %s84, %s85
    %p99 = scmp.eq.s32.totalorder %s14, 1
    %p100 = por %p98, %p99
    %p102 = scmp.ne.s32.totalorder %s85, %s101
    %p103 = scmp.eq.s32.totalorder %s14, 0
    %p104 = por %p102, %p103
    %p105 = scmp.le.s32.totalorder 1, %s8
    %p106 = scmp.lt.s32.totalorder %s8, 3
    %p107 = pnand %p105, %p106
    %p108 = pneg %p107
    // Predicated region
    $region9: #{tpu_custom_call.1} parent=5 // pred_check
      _
    $region10: #{tpu_custom_call.1} parent=5 // pred_check_branch
      %110 = sbr.rel (%p107) target = $region12
    $region11: #{tpu_custom_call.1} parent=5 // pred_region
      %s111 = ssub.s32 %s8, 1
      // Predicated region
      $region13: #{tpu_custom_call.1} parent=11 // pred_check
        %p112 = pneg %p69
      $region14: #{tpu_custom_call.1} parent=11 // pred_check_branch
        %114 = sbr.rel (%p112) target = $region16
      $region15: #{tpu_custom_call.1} parent=11 // pred_region
        _
      $region16: #{tpu_custom_call.1} parent=11 // pred_fallthru
        _
    $region12: #{tpu_custom_call.1} parent=5 // pred_fallthru
      _
    %p115 = scmp.lt.s32.totalorder %s8, 2
    // Predicated region
    $region17: #{tpu_custom_call.1} parent=5 // pred_check
      %p116 = pneg %p115
    $region18: #{tpu_custom_call.1} parent=5 // pred_check_branch
      %118 = sbr.rel (%p116) target = $region20
    $region19: #{tpu_custom_call.1} parent=5 // pred_region
      // Predicated region
      $region21: #{tpu_custom_call.1} parent=19 // pred_check
        %p119 = pneg %p42
      $region22: #{tpu_custom_call.1} parent=19 // pred_check_branch
        %121 = sbr.rel (%p119) target = $region24
      $region23: #{tpu_custom_call.1} parent=19 // pred_region
        %s122 = smul.u32 48, %s16
        %p123 = scmp.lt.s32.totalorder %s15, 1
        %s124 = scalar_select %p123, %s15, 1
        %p125 = scmp.lt.s32.totalorder %s122, 47
        %s126 = scalar_select %p125, %s122, 47
        %s127 = smul.addr %s126, 3
        %s128 = smul.addr %s124, 288
        %s129 = sadd.s32 %s127, %s128
        %s130 = smul.addr %s129, 4
        %s131 = scalar_lea.vmem %s0, %s130
        %s132 = smul.u32 48, %s16
      $region24: #{tpu_custom_call.1} parent=19 // pred_fallthru
        _
    $region20: #{tpu_custom_call.1} parent=5 // pred_fallthru
      _
    %p133 = scmp.le.s32.totalorder 1, %s8
    %p134 = scmp.lt.s32.totalorder %s8, 3
    %p135 = pnand %p133, %p134
    %p136 = pneg %p135
    // Predicated region
    $region25: #{tpu_custom_call.1} parent=5 // pred_check
      _
    $region26: #{tpu_custom_call.1} parent=5 // pred_check_branch
      %138 = sbr.rel (%p135) target = $region28
    $region27: #{tpu_custom_call.1} parent=5 // pred_region
      %s139 = ssub.s32 %s8, 1
      %s140 = smul.u32 48, %s18
      %p141 = scmp.lt.s32.totalorder %s17, 1
      %s142 = scalar_select %p141, %s17, 1
      %p143 = scmp.lt.s32.totalorder %s140, 47
      %s144 = scalar_select %p143, %s140, 47
      %s145 = smul.addr %s144, 3
      %s146 = smul.addr %s142, 288
      %s147 = sadd.s32 %s145, %s146
      %s148 = smul.addr %s147, 4
      %s149 = scalar_lea.vmem %s0, %s148
      %p150 = pneg %p48
      %p151 = pneg %p45
      %p152 = pneg %p69
      %p153 = pneg %p66
      %p154 = pneg %p97
      %p155 = pneg %p94
      %s156 = smul.u32 48, %s18
      %p157 = scmp.lt.s32.totalorder %s17, 1
      %s158 = scalar_select %p157, %s17, 1
      %p159 = scmp.lt.s32.totalorder %s156, 47
      %s160 = scalar_select %p159, %s156, 47
      %s161 = smul.addr %s158, 48
      %s162 = sadd.s32 %s160, %s161
      %s163 = smul.addr %s162, 8
      %s164 = scalar_lea.vmem %s2, %s163
      %s165 = smul.u32 48, %s18
      %p166 = scmp.lt.s32.totalorder %s17, 1
      %s167 = scalar_select %p166, %s17, 1
      %p168 = scmp.lt.s32.totalorder %s165, 47
      %s169 = scalar_select %p168, %s165, 47
      %s170 = smul.addr %s169, 3
      %s171 = smul.addr %s167, 288
      %s172 = sadd.s32 %s170, %s171
      %s173 = smul.addr %s172, 4
      %s174 = scalar_lea.vmem %s0, %s173
      %s175 = smul.u32 48, %s18
      %s176 = smul.u32 48, %s18
      %p177 = scmp.lt.s32.totalorder %s17, 1
      %s178 = scalar_select %p177, %s17, 1
      %p179 = scmp.lt.s32.totalorder %s176, 47
      %s180 = scalar_select %p179, %s176, 47
      %s181 = smul.addr %s178, 48
      %s182 = sadd.s32 %s180, %s181
      %s183 = smul.addr %s182, 8
      %s184 = scalar_lea.vmem %s2, %s183
      %s185 = smul.u32 48, %s18
      %v187 = vld [vmem:[%s174] sm:$0xff]
      %v188 = vld [vmem:[%s174 + $0x8] sm:$0xf]
      %v189 = vld [vmem:[%s174 + $0xc] sm:$0xff]
      %v190 = vld [vmem:[%s174 + $0x14] sm:$0xf]
      %v191 = vld [vmem:[%s174 + $0x18] sm:$0xff]
      %v192 = vld [vmem:[%s174 + $0x20] sm:$0xf]
      %v193 = vld [vmem:[%s174 + $0x24] sm:$0xff]
      %v194 = vld [vmem:[%s174 + $0x2c] sm:$0xf]
      %v195 = vld [vmem:[%s174 + $0x30] sm:$0xff]
      %v196 = vld [vmem:[%s174 + $0x38] sm:$0xf]
      %v197 = vld [vmem:[%s174 + $0x3c] sm:$0xff]
      %v198 = vld [vmem:[%s174 + $0x44] sm:$0xf]
      %v199 = vld [vmem:[%s174 + $0x48] sm:$0xff]
      %v200 = vld [vmem:[%s174 + $0x50] sm:$0xf]
      %v201 = vld [vmem:[%s174 + $0x54] sm:$0xff]
      %v202 = vld [vmem:[%s174 + $0x5c] sm:$0xf]
      %v203 = vld [vmem:[%s174 + $0x60] sm:$0xff]
      %v204 = vld [vmem:[%s174 + $0x68] sm:$0xf]
      %v205 = vld [vmem:[%s174 + $0x6c] sm:$0xff]
      %v206 = vld [vmem:[%s174 + $0x74] sm:$0xf]
      %v207 = vld [vmem:[%s174 + $0x78] sm:$0xff]
      %v208 = vld [vmem:[%s174 + $0x80] sm:$0xf]
      %v209 = vld [vmem:[%s174 + $0x84] sm:$0xff]
      %v210 = vld [vmem:[%s174 + $0x8c] sm:$0xf]
      %v211 = vld [vmem:[%s174 + $0x90] sm:$0xff]
      %v212 = vld [vmem:[%s174 + $0x98] sm:$0xf]
      %v213 = vld [vmem:[%s174 + $0x9c] sm:$0xff]
      %v214 = vld [vmem:[%s174 + $0xa4] sm:$0xf]
      %v215 = vld [vmem:[%s174 + $0xa8] sm:$0xff]
      %v216 = vld [vmem:[%s174 + $0xb0] sm:$0xf]
      %v217 = vld [vmem:[%s174 + $0xb4] sm:$0xff]
      %v218 = vld [vmem:[%s174 + $0xbc] sm:$0xf]
      %v219 = vld [vmem:[%s174 + $0xc0] sm:$0xff]
      %v220 = vld [vmem:[%s174 + $0xc8] sm:$0xf]
      %v221 = vld [vmem:[%s174 + $0xcc] sm:$0xff]
      %v222 = vld [vmem:[%s174 + $0xd4] sm:$0xf]
      %v223 = vld [vmem:[%s174 + $0xd8] sm:$0xff]
      %v224 = vld [vmem:[%s174 + $0xe0] sm:$0xf]
      %v225 = vld [vmem:[%s174 + $0xe4] sm:$0xff]
      %v226 = vld [vmem:[%s174 + $0xec] sm:$0xf]
      %v227 = vld [vmem:[%s174 + $0xf0] sm:$0xff]
      %v228 = vld [vmem:[%s174 + $0xf8] sm:$0xf]
      %v229 = vld [vmem:[%s174 + $0xfc] sm:$0xff]
      %v230 = vld [vmem:[%s174 + $0x104] sm:$0xf]
      %v231 = vld [vmem:[%s174 + $0x108] sm:$0xff]
      %v232 = vld [vmem:[%s174 + $0x110] sm:$0xf]
      %v233 = vld [vmem:[%s174 + $0x114] sm:$0xff]
      %v234 = vld [vmem:[%s174 + $0x11c] sm:$0xf]
      %v235 = vld [vmem:[%s174 + $0x120] sm:$0xff]
      %v236 = vld [vmem:[%s174 + $0x128] sm:$0xf]
      %v237 = vld [vmem:[%s174 + $0x12c] sm:$0xff]
      %v238 = vld [vmem:[%s174 + $0x134] sm:$0xf]
      %v239 = vld [vmem:[%s174 + $0x138] sm:$0xff]
      %v240 = vld [vmem:[%s174 + $0x140] sm:$0xf]
      %v241 = vld [vmem:[%s174 + $0x144] sm:$0xff]
      %v242 = vld [vmem:[%s174 + $0x14c] sm:$0xf]
      %v243 = vld [vmem:[%s174 + $0x150] sm:$0xff]
      %v244 = vld [vmem:[%s174 + $0x158] sm:$0xf]
      %v245 = vld [vmem:[%s174 + $0x15c] sm:$0xff]
      %v246 = vld [vmem:[%s174 + $0x164] sm:$0xf]
      %v247 = vld [vmem:[%s174 + $0x168] sm:$0xff]
      %v248 = vld [vmem:[%s174 + $0x170] sm:$0xf]
      %v249 = vld [vmem:[%s174 + $0x174] sm:$0xff]
      %v250 = vld [vmem:[%s174 + $0x17c] sm:$0xf]
      %v251 = vld [vmem:[%s174 + $0x180] sm:$0xff]
      %v252 = vld [vmem:[%s174 + $0x188] sm:$0xf]
      %v253 = vld [vmem:[%s174 + $0x18c] sm:$0xff]
      %v254 = vld [vmem:[%s174 + $0x194] sm:$0xf]
      %v255 = vld [vmem:[%s174 + $0x198] sm:$0xff]
      %v256 = vld [vmem:[%s174 + $0x1a0] sm:$0xf]
      %v257 = vld [vmem:[%s174 + $0x1a4] sm:$0xff]
      %v258 = vld [vmem:[%s174 + $0x1ac] sm:$0xf]
      %v259 = vld [vmem:[%s174 + $0x1b0] sm:$0xff]
      %v260 = vld [vmem:[%s174 + $0x1b8] sm:$0xf]
      %v261 = vld [vmem:[%s174 + $0x1bc] sm:$0xff]
      %v262 = vld [vmem:[%s174 + $0x1c4] sm:$0xf]
      %v263 = vld [vmem:[%s174 + $0x1c8] sm:$0xff]
      %v264 = vld [vmem:[%s174 + $0x1d0] sm:$0xf]
      %v265 = vld [vmem:[%s174 + $0x1d4] sm:$0xff]
      %v266 = vld [vmem:[%s174 + $0x1dc] sm:$0xf]
      %v267 = vld [vmem:[%s174 + $0x1e0] sm:$0xff]
      %v268 = vld [vmem:[%s174 + $0x1e8] sm:$0xf]
      %v269 = vld [vmem:[%s174 + $0x1ec] sm:$0xff]
      %v270 = vld [vmem:[%s174 + $0x1f4] sm:$0xf]
      %v271 = vld [vmem:[%s174 + $0x1f8] sm:$0xff]
      %v272 = vld [vmem:[%s174 + $0x200] sm:$0xf]
      %v273 = vld [vmem:[%s174 + $0x204] sm:$0xff]
      %v274 = vld [vmem:[%s174 + $0x20c] sm:$0xf]
      %v275 = vld [vmem:[%s174 + $0x210] sm:$0xff]
      %v276 = vld [vmem:[%s174 + $0x218] sm:$0xf]
      %v277 = vld [vmem:[%s174 + $0x21c] sm:$0xff]
      %v278 = vld [vmem:[%s174 + $0x224] sm:$0xf]
      %v279 = vld [vmem:[%s174 + $0x228] sm:$0xff]
      %v280 = vld [vmem:[%s174 + $0x230] sm:$0xf]
      %v281 = vld [vmem:[%s174 + $0x234] sm:$0xff]
      %v282 = vld [vmem:[%s174 + $0x23c] sm:$0xf]
      %v283 = vld [vmem:[%s1] sm:$0xf]
      %v284 = vld [vmem:[%s1 + $0x4] sm:$0xf]
      %v285 = vld [vmem:[%s1 + $0x8] sm:$0xf]
      %v286 = vld [vmem:[%s1 + $0xc] sm:$0xf]
      %v287 = vld [vmem:[%s1 + $0x10] sm:$0xf]
      %v288 = vld [vmem:[%s1 + $0x14] sm:$0xf]
      %v289 = vld [vmem:[%s1 + $0x18] sm:$0xf]
      %v290 = vld [vmem:[%s1 + $0x1c] sm:$0xf]
      %v291 = vld [vmem:[%s1 + $0x20] sm:$0xf]
      %v292 = vld [vmem:[%s1 + $0x24] sm:$0xf]
      %v293 = vld [vmem:[%s1 + $0x28] sm:$0xf]
      %v294 = vld [vmem:[%s1 + $0x2c] sm:$0xf]
      %v295 = vld [vmem:[%s1 + $0x30] sm:$0xf]
      %v296 = vld [vmem:[%s1 + $0x34] sm:$0xf]
      %v297 = vld [vmem:[%s1 + $0x38] sm:$0xf]
      %v298 = vld [vmem:[%s1 + $0x3c] sm:$0xf]
      %v299 = vld [vmem:[%s1 + $0x40] sm:$0xf]
      %v300 = vld [vmem:[%s1 + $0x44] sm:$0xf]
      %v301 = vld [vmem:[%s1 + $0x48] sm:$0xf]
      %v302 = vld [vmem:[%s1 + $0x4c] sm:$0xf]
      %v303 = vld [vmem:[%s1 + $0x50] sm:$0xf]
      %v304 = vld [vmem:[%s1 + $0x54] sm:$0xf]
      %v305 = vld [vmem:[%s1 + $0x58] sm:$0xf]
      %v306 = vld [vmem:[%s1 + $0x5c] sm:$0xf]
      %v307 = vld [vmem:[%s1 + $0x60] sm:$0xf]
      %v308 = vld [vmem:[%s1 + $0x64] sm:$0xf]
      %v309 = vld [vmem:[%s1 + $0x68] sm:$0xf]
      %v310 = vld [vmem:[%s1 + $0x6c] sm:$0xf]
      %v311 = vld [vmem:[%s1 + $0x70] sm:$0xf]
      %v312 = vld [vmem:[%s1 + $0x74] sm:$0xf]
      %v313 = vld [vmem:[%s1 + $0x78] sm:$0xf]
      %v314 = vld [vmem:[%s1 + $0x7c] sm:$0xf]
      %v315 = vld [vmem:[%s1 + $0x80] sm:$0xf]
      %v316 = vld [vmem:[%s1 + $0x84] sm:$0xf]
      %v317 = vld [vmem:[%s1 + $0x88] sm:$0xf]
      %v318 = vld [vmem:[%s1 + $0x8c] sm:$0xf]
      %v319 = vld [vmem:[%s1 + $0x90] sm:$0xf]
      %v320 = vld [vmem:[%s1 + $0x94] sm:$0xf]
      %v321 = vld [vmem:[%s1 + $0x98] sm:$0xf]
      %v322 = vld [vmem:[%s1 + $0x9c] sm:$0xf]
      %s323 = scalar_lea.vmem %s174, 576
      %v324 = vld [vmem:[%s323] sm:$0xff]
      %v325 = vld [vmem:[%s323 + $0x8] sm:$0xf]
      %v326 = vld [vmem:[%s323 + $0xc] sm:$0xff]
      %v327 = vld [vmem:[%s323 + $0x14] sm:$0xf]
      %v328 = vld [vmem:[%s323 + $0x18] sm:$0xff]
      %v329 = vld [vmem:[%s323 + $0x20] sm:$0xf]
      %v330 = vld [vmem:[%s323 + $0x24] sm:$0xff]
      %v331 = vld [vmem:[%s323 + $0x2c] sm:$0xf]
      %v332 = vld [vmem:[%s323 + $0x30] sm:$0xff]
      %v333 = vld [vmem:[%s323 + $0x38] sm:$0xf]
      %v334 = vld [vmem:[%s323 + $0x3c] sm:$0xff]
      %v335 = vld [vmem:[%s323 + $0x44] sm:$0xf]
      %v336 = vld [vmem:[%s323 + $0x48] sm:$0xff]
      %v337 = vld [vmem:[%s323 + $0x50] sm:$0xf]
      %v338 = vld [vmem:[%s323 + $0x54] sm:$0xff]
      %v339 = vld [vmem:[%s323 + $0x5c] sm:$0xf]
      %v340 = vld [vmem:[%s323 + $0x60] sm:$0xff]
      %v341 = vld [vmem:[%s323 + $0x68] sm:$0xf]
      %v342 = vld [vmem:[%s323 + $0x6c] sm:$0xff]
      %v343 = vld [vmem:[%s323 + $0x74] sm:$0xf]
      %v344 = vld [vmem:[%s323 + $0x78] sm:$0xff]
      %v345 = vld [vmem:[%s323 + $0x80] sm:$0xf]
      %v346 = vld [vmem:[%s323 + $0x84] sm:$0xff]
      %v347 = vld [vmem:[%s323 + $0x8c] sm:$0xf]
      %v348 = vld [vmem:[%s323 + $0x90] sm:$0xff]
      %v349 = vld [vmem:[%s323 + $0x98] sm:$0xf]
      %v350 = vld [vmem:[%s323 + $0x9c] sm:$0xff]
      %v351 = vld [vmem:[%s323 + $0xa4] sm:$0xf]
      %v352 = vld [vmem:[%s323 + $0xa8] sm:$0xff]
      %v353 = vld [vmem:[%s323 + $0xb0] sm:$0xf]
      %v354 = vld [vmem:[%s323 + $0xb4] sm:$0xff]
      %v355 = vld [vmem:[%s323 + $0xbc] sm:$0xf]
      %v356 = vld [vmem:[%s323 + $0xc0] sm:$0xff]
      %v357 = vld [vmem:[%s323 + $0xc8] sm:$0xf]
      %v358 = vld [vmem:[%s323 + $0xcc] sm:$0xff]
      %v359 = vld [vmem:[%s323 + $0xd4] sm:$0xf]
      %v360 = vld [vmem:[%s323 + $0xd8] sm:$0xff]
      %v361 = vld [vmem:[%s323 + $0xe0] sm:$0xf]
      %v362 = vld [vmem:[%s323 + $0xe4] sm:$0xff]
      %v363 = vld [vmem:[%s323 + $0xec] sm:$0xf]
      %v364 = vld [vmem:[%s323 + $0xf0] sm:$0xff]
      %v365 = vld [vmem:[%s323 + $0xf8] sm:$0xf]
      %v366 = vld [vmem:[%s323 + $0xfc] sm:$0xff]
      %v367 = vld [vmem:[%s323 + $0x104] sm:$0xf]
      %v368 = vld [vmem:[%s323 + $0x108] sm:$0xff]
      %v369 = vld [vmem:[%s323 + $0x110] sm:$0xf]
      %v370 = vld [vmem:[%s323 + $0x114] sm:$0xff]
      %v371 = vld [vmem:[%s323 + $0x11c] sm:$0xf]
      %v372 = vld [vmem:[%s323 + $0x120] sm:$0xff]
      %v373 = vld [vmem:[%s323 + $0x128] sm:$0xf]
      %v374 = vld [vmem:[%s323 + $0x12c] sm:$0xff]
      %v375 = vld [vmem:[%s323 + $0x134] sm:$0xf]
      %v376 = vld [vmem:[%s323 + $0x138] sm:$0xff]
      %v377 = vld [vmem:[%s323 + $0x140] sm:$0xf]
      %v378 = vld [vmem:[%s323 + $0x144] sm:$0xff]
      %v379 = vld [vmem:[%s323 + $0x14c] sm:$0xf]
      %v380 = vld [vmem:[%s323 + $0x150] sm:$0xff]
      %v381 = vld [vmem:[%s323 + $0x158] sm:$0xf]
      %v382 = vld [vmem:[%s323 + $0x15c] sm:$0xff]
      %v383 = vld [vmem:[%s323 + $0x164] sm:$0xf]
      %v384 = vld [vmem:[%s323 + $0x168] sm:$0xff]
      %v385 = vld [vmem:[%s323 + $0x170] sm:$0xf]
      %v386 = vld [vmem:[%s323 + $0x174] sm:$0xff]
      %v387 = vld [vmem:[%s323 + $0x17c] sm:$0xf]
      %v388 = vld [vmem:[%s323 + $0x180] sm:$0xff]
      %v389 = vld [vmem:[%s323 + $0x188] sm:$0xf]
      %v390 = vld [vmem:[%s323 + $0x18c] sm:$0xff]
      %v391 = vld [vmem:[%s323 + $0x194] sm:$0xf]
      %v392 = vld [vmem:[%s323 + $0x198] sm:$0xff]
      %v393 = vld [vmem:[%s323 + $0x1a0] sm:$0xf]
      %v394 = vld [vmem:[%s323 + $0x1a4] sm:$0xff]
      %v395 = vld [vmem:[%s323 + $0x1ac] sm:$0xf]
      %v396 = vld [vmem:[%s323 + $0x1b0] sm:$0xff]
      %v397 = vld [vmem:[%s323 + $0x1b8] sm:$0xf]
      %v398 = vld [vmem:[%s323 + $0x1bc] sm:$0xff]
      %v399 = vld [vmem:[%s323 + $0x1c4] sm:$0xf]
      %v400 = vld [vmem:[%s323 + $0x1c8] sm:$0xff]
      %v401 = vld [vmem:[%s323 + $0x1d0] sm:$0xf]
      %v402 = vld [vmem:[%s323 + $0x1d4] sm:$0xff]
      %v403 = vld [vmem:[%s323 + $0x1dc] sm:$0xf]
      %v404 = vld [vmem:[%s323 + $0x1e0] sm:$0xff]
      %v405 = vld [vmem:[%s323 + $0x1e8] sm:$0xf]
      %v406 = vld [vmem:[%s323 + $0x1ec] sm:$0xff]
      %v407 = vld [vmem:[%s323 + $0x1f4] sm:$0xf]
      %v408 = vld [vmem:[%s323 + $0x1f8] sm:$0xff]
      %v409 = vld [vmem:[%s323 + $0x200] sm:$0xf]
      %v410 = vld [vmem:[%s323 + $0x204] sm:$0xff]
      %v411 = vld [vmem:[%s323 + $0x20c] sm:$0xf]
      %v412 = vld [vmem:[%s323 + $0x210] sm:$0xff]
      %v413 = vld [vmem:[%s323 + $0x218] sm:$0xf]
      %v414 = vld [vmem:[%s323 + $0x21c] sm:$0xff]
      %v415 = vld [vmem:[%s323 + $0x224] sm:$0xf]
      %v416 = vld [vmem:[%s323 + $0x228] sm:$0xff]
      %v417 = vld [vmem:[%s323 + $0x230] sm:$0xf]
      %v418 = vld [vmem:[%s323 + $0x234] sm:$0xff]
      %v419 = vld [vmem:[%s323 + $0x23c] sm:$0xf]
      %s420 = scalar_lea.vmem %s1, 160
      %v421 = vld [vmem:[%s420] sm:$0xf]
      %v422 = vld [vmem:[%s420 + $0x4] sm:$0xf]
      %v423 = vld [vmem:[%s420 + $0x8] sm:$0xf]
      %v424 = vld [vmem:[%s420 + $0xc] sm:$0xf]
      %v425 = vld [vmem:[%s420 + $0x10] sm:$0xf]
      %v426 = vld [vmem:[%s420 + $0x14] sm:$0xf]
      %v427 = vld [vmem:[%s420 + $0x18] sm:$0xf]
      %v428 = vld [vmem:[%s420 + $0x1c] sm:$0xf]
      %v429 = vld [vmem:[%s420 + $0x20] sm:$0xf]
      %v430 = vld [vmem:[%s420 + $0x24] sm:$0xf]
      %v431 = vld [vmem:[%s420 + $0x28] sm:$0xf]
      %v432 = vld [vmem:[%s420 + $0x2c] sm:$0xf]
      %v433 = vld [vmem:[%s420 + $0x30] sm:$0xf]
      %v434 = vld [vmem:[%s420 + $0x34] sm:$0xf]
      %v435 = vld [vmem:[%s420 + $0x38] sm:$0xf]
      %v436 = vld [vmem:[%s420 + $0x3c] sm:$0xf]
      %v437 = vld [vmem:[%s420 + $0x40] sm:$0xf]
      %v438 = vld [vmem:[%s420 + $0x44] sm:$0xf]
      %v439 = vld [vmem:[%s420 + $0x48] sm:$0xf]
      %v440 = vld [vmem:[%s420 + $0x4c] sm:$0xf]
      %v441 = vld [vmem:[%s420 + $0x50] sm:$0xf]
      %v442 = vld [vmem:[%s420 + $0x54] sm:$0xf]
      %v443 = vld [vmem:[%s420 + $0x58] sm:$0xf]
      %v444 = vld [vmem:[%s420 + $0x5c] sm:$0xf]
      %v445 = vld [vmem:[%s420 + $0x60] sm:$0xf]
      %v446 = vld [vmem:[%s420 + $0x64] sm:$0xf]
      %v447 = vld [vmem:[%s420 + $0x68] sm:$0xf]
      %v448 = vld [vmem:[%s420 + $0x6c] sm:$0xf]
      %v449 = vld [vmem:[%s420 + $0x70] sm:$0xf]
      %v450 = vld [vmem:[%s420 + $0x74] sm:$0xf]
      %v451 = vld [vmem:[%s420 + $0x78] sm:$0xf]
      %v452 = vld [vmem:[%s420 + $0x7c] sm:$0xf]
      %v453 = vld [vmem:[%s420 + $0x80] sm:$0xf]
      %v454 = vld [vmem:[%s420 + $0x84] sm:$0xf]
      %v455 = vld [vmem:[%s420 + $0x88] sm:$0xf]
      %v456 = vld [vmem:[%s420 + $0x8c] sm:$0xf]
      %v457 = vld [vmem:[%s420 + $0x90] sm:$0xf]
      %v458 = vld [vmem:[%s420 + $0x94] sm:$0xf]
      %v459 = vld [vmem:[%s420 + $0x98] sm:$0xf]
      %v460 = vld [vmem:[%s420 + $0x9c] sm:$0xf]
      %v557 = vunpack.c.l.b16 %v324
      %v558 = vunpack.c.h.b16 %v324
      %v559 = vunpack.c.l.b16 %v325
      %v560 = vunpack.c.l.b16 %v326
      %v561 = vunpack.c.h.b16 %v326
      %v562 = vunpack.c.l.b16 %v327
      %v563 = vunpack.c.l.b16 %v328
      %v564 = vunpack.c.h.b16 %v328
      %v565 = vunpack.c.l.b16 %v329
      %v566 = vunpack.c.l.b16 %v330
      %v567 = vunpack.c.h.b16 %v330
      %v568 = vunpack.c.l.b16 %v331
      %v569 = vunpack.c.l.b16 %v332
      %v570 = vunpack.c.h.b16 %v332
      %v571 = vunpack.c.l.b16 %v333
      %v572 = vunpack.c.l.b16 %v334
      %v573 = vunpack.c.h.b16 %v334
      %v574 = vunpack.c.l.b16 %v335
      %v575 = vunpack.c.l.b16 %v336
      %v576 = vunpack.c.h.b16 %v336
      %v577 = vunpack.c.l.b16 %v337
      %v578 = vunpack.c.l.b16 %v338
      %v579 = vunpack.c.h.b16 %v338
      %v580 = vunpack.c.l.b16 %v339
      %v581 = vunpack.c.l.b16 %v340
      %v582 = vunpack.c.h.b16 %v340
      %v583 = vunpack.c.l.b16 %v341
      %v584 = vunpack.c.l.b16 %v342
      %v585 = vunpack.c.h.b16 %v342
      %v586 = vunpack.c.l.b16 %v343
      %v587 = vunpack.c.l.b16 %v344
      %v588 = vunpack.c.h.b16 %v344
      %v589 = vunpack.c.l.b16 %v345
      %v590 = vunpack.c.l.b16 %v346
      %v591 = vunpack.c.h.b16 %v346
      %v592 = vunpack.c.l.b16 %v347
      %v593 = vunpack.c.l.b16 %v348
      %v594 = vunpack.c.h.b16 %v348
      %v595 = vunpack.c.l.b16 %v349
      %v596 = vunpack.c.l.b16 %v350
      %v597 = vunpack.c.h.b16 %v350
      %v598 = vunpack.c.l.b16 %v351
      %v599 = vunpack.c.l.b16 %v352
      %v600 = vunpack.c.h.b16 %v352
      %v601 = vunpack.c.l.b16 %v353
      %v602 = vunpack.c.l.b16 %v354
      %v603 = vunpack.c.h.b16 %v354
      %v604 = vunpack.c.l.b16 %v355
      %v605 = vunpack.c.l.b16 %v356
      %v606 = vunpack.c.h.b16 %v356
      %v607 = vunpack.c.l.b16 %v357
      %v608 = vunpack.c.l.b16 %v358
      %v609 = vunpack.c.h.b16 %v358
      %v610 = vunpack.c.l.b16 %v359
      %v611 = vunpack.c.l.b16 %v360
      %v612 = vunpack.c.h.b16 %v360
      %v613 = vunpack.c.l.b16 %v361
      %v614 = vunpack.c.l.b16 %v362
      %v615 = vunpack.c.h.b16 %v362
      %v616 = vunpack.c.l.b16 %v363
      %v617 = vunpack.c.l.b16 %v364
      %v618 = vunpack.c.h.b16 %v364
      %v619 = vunpack.c.l.b16 %v365
      %v620 = vunpack.c.l.b16 %v366
      %v621 = vunpack.c.h.b16 %v366
      %v622 = vunpack.c.l.b16 %v367
      %v623 = vunpack.c.l.b16 %v368
      %v624 = vunpack.c.h.b16 %v368
      %v625 = vunpack.c.l.b16 %v369
      %v626 = vunpack.c.l.b16 %v370
      %v627 = vunpack.c.h.b16 %v370
      %v628 = vunpack.c.l.b16 %v371
      %v629 = vunpack.c.l.b16 %v372
      %v630 = vunpack.c.h.b16 %v372
      %v631 = vunpack.c.l.b16 %v373
      %v632 = vunpack.c.l.b16 %v374
      %v633 = vunpack.c.h.b16 %v374
      %v634 = vunpack.c.l.b16 %v375
      %v635 = vunpack.c.l.b16 %v376
      %v636 = vunpack.c.h.b16 %v376
      %v637 = vunpack.c.l.b16 %v377
      %v638 = vunpack.c.l.b16 %v378
      %v639 = vunpack.c.h.b16 %v378
      %v640 = vunpack.c.l.b16 %v379
      %v641 = vunpack.c.l.b16 %v380
      %v642 = vunpack.c.h.b16 %v380
      %v643 = vunpack.c.l.b16 %v381
      %v644 = vunpack.c.l.b16 %v382
      %v645 = vunpack.c.h.b16 %v382
      %v646 = vunpack.c.l.b16 %v383
      %v647 = vunpack.c.l.b16 %v384
      %v648 = vunpack.c.h.b16 %v384
      %v649 = vunpack.c.l.b16 %v385
      %v650 = vunpack.c.l.b16 %v386
      %v651 = vunpack.c.h.b16 %v386
      %v652 = vunpack.c.l.b16 %v387
      %v653 = vunpack.c.l.b16 %v388
      %v654 = vunpack.c.h.b16 %v388
      %v655 = vunpack.c.l.b16 %v389
      %v656 = vunpack.c.l.b16 %v390
      %v657 = vunpack.c.h.b16 %v390
      %v658 = vunpack.c.l.b16 %v391
      %v659 = vunpack.c.l.b16 %v392
      %v660 = vunpack.c.h.b16 %v392
      %v661 = vunpack.c.l.b16 %v393
      %v662 = vunpack.c.l.b16 %v394
      %v663 = vunpack.c.h.b16 %v394
      %v664 = vunpack.c.l.b16 %v395
      %v665 = vunpack.c.l.b16 %v396
      %v666 = vunpack.c.h.b16 %v396
      %v667 = vunpack.c.l.b16 %v397
      %v668 = vunpack.c.l.b16 %v398
      %v669 = vunpack.c.h.b16 %v398
      %v670 = vunpack.c.l.b16 %v399
      %v671 = vunpack.c.l.b16 %v400
      %v672 = vunpack.c.h.b16 %v400
      %v673 = vunpack.c.l.b16 %v401
      %v674 = vunpack.c.l.b16 %v402
      %v675 = vunpack.c.h.b16 %v402
      %v676 = vunpack.c.l.b16 %v403
      %v677 = vunpack.c.l.b16 %v404
      %v678 = vunpack.c.h.b16 %v404
      %v679 = vunpack.c.l.b16 %v405
      %v680 = vunpack.c.l.b16 %v406
      %v681 = vunpack.c.h.b16 %v406
      %v682 = vunpack.c.l.b16 %v407
      %v683 = vunpack.c.l.b16 %v408
      %v684 = vunpack.c.h.b16 %v408
      %v685 = vunpack.c.l.b16 %v409
      %v686 = vunpack.c.l.b16 %v410
      %v687 = vunpack.c.h.b16 %v410
      %v688 = vunpack.c.l.b16 %v411
      %v689 = vunpack.c.l.b16 %v412
      %v690 = vunpack.c.h.b16 %v412
      %v691 = vunpack.c.l.b16 %v413
      %v692 = vunpack.c.l.b16 %v414
      %v693 = vunpack.c.h.b16 %v414
      %v694 = vunpack.c.l.b16 %v415
      %v695 = vunpack.c.l.b16 %v416
      %v696 = vunpack.c.h.b16 %v416
      %v697 = vunpack.c.l.b16 %v417
      %v698 = vunpack.c.l.b16 %v418
      %v699 = vunpack.c.h.b16 %v418
      %v700 = vunpack.c.l.b16 %v419
      %v701 = vpack.c.b16 %v560, %v557
      %v702 = vpack.c.b16 %v561, %v558
      %v703 = vpack.c.b16 %v562, %v559
      %v704 = vpack.c.b16 %v566, %v563
      %v705 = vpack.c.b16 %v567, %v564
      %v706 = vpack.c.b16 %v568, %v565
      %v707 = vpack.c.b16 %v572, %v569
      %v708 = vpack.c.b16 %v573, %v570
      %v709 = vpack.c.b16 %v574, %v571
      %v710 = vpack.c.b16 %v578, %v575
      %v711 = vpack.c.b16 %v579, %v576
      %v712 = vpack.c.b16 %v580, %v577
      %v713 = vpack.c.b16 %v584, %v581
      %v714 = vpack.c.b16 %v585, %v582
      %v715 = vpack.c.b16 %v586, %v583
      %v716 = vpack.c.b16 %v590, %v587
      %v717 = vpack.c.b16 %v591, %v588
      %v718 = vpack.c.b16 %v592, %v589
      %v719 = vpack.c.b16 %v596, %v593
      %v720 = vpack.c.b16 %v597, %v594
      %v721 = vpack.c.b16 %v598, %v595
      %v722 = vpack.c.b16 %v602, %v599
      %v723 = vpack.c.b16 %v603, %v600
      %v724 = vpack.c.b16 %v604, %v601
      %v725 = vpack.c.b16 %v608, %v605
      %v726 = vpack.c.b16 %v609, %v606
      %v727 = vpack.c.b16 %v610, %v607
      %v728 = vpack.c.b16 %v614, %v611
      %v729 = vpack.c.b16 %v615, %v612
      %v730 = vpack.c.b16 %v616, %v613
      %v731 = vpack.c.b16 %v620, %v617
      %v732 = vpack.c.b16 %v621, %v618
      %v733 = vpack.c.b16 %v622, %v619
      %v734 = vpack.c.b16 %v626, %v623
      %v735 = vpack.c.b16 %v627, %v624
      %v736 = vpack.c.b16 %v628, %v625
      %v737 = vpack.c.b16 %v632, %v629
      %v738 = vpack.c.b16 %v633, %v630
      %v739 = vpack.c.b16 %v634, %v631
      %v740 = vpack.c.b16 %v638, %v635
      %v741 = vpack.c.b16 %v639, %v636
      %v742 = vpack.c.b16 %v640, %v637
      %v743 = vpack.c.b16 %v644, %v641
      %v744 = vpack.c.b16 %v645, %v642
      %v745 = vpack.c.b16 %v646, %v643
      %v746 = vpack.c.b16 %v650, %v647
      %v747 = vpack.c.b16 %v651, %v648
      %v748 = vpack.c.b16 %v652, %v649
      %v749 = vpack.c.b16 %v656, %v653
      %v750 = vpack.c.b16 %v657, %v654
      %v751 = vpack.c.b16 %v658, %v655
      %v752 = vpack.c.b16 %v662, %v659
      %v753 = vpack.c.b16 %v663, %v660
      %v754 = vpack.c.b16 %v664, %v661
      %v755 = vpack.c.b16 %v668, %v665
      %v756 = vpack.c.b16 %v669, %v666
      %v757 = vpack.c.b16 %v670, %v667
      %v758 = vpack.c.b16 %v674, %v671
      %v759 = vpack.c.b16 %v675, %v672
      %v760 = vpack.c.b16 %v676, %v673
      %v761 = vpack.c.b16 %v680, %v677
      %v762 = vpack.c.b16 %v681, %v678
      %v763 = vpack.c.b16 %v682, %v679
      %v764 = vpack.c.b16 %v686, %v683
      %v765 = vpack.c.b16 %v687, %v684
      %v766 = vpack.c.b16 %v688, %v685
      %v767 = vpack.c.b16 %v692, %v689
      %v768 = vpack.c.b16 %v693, %v690
      %v769 = vpack.c.b16 %v694, %v691
      %v770 = vpack.c.b16 %v698, %v695
      %v771 = vpack.c.b16 %v699, %v696
      %v772 = vpack.c.b16 %v700, %v697
      %v861 = vunpack.c.l.b16 %v421
      %v862 = vunpack.c.l.b16 %v422
      %v863 = vunpack.c.l.b16 %v423
      %v864 = vunpack.c.l.b16 %v424
      %v865 = vunpack.c.l.b16 %v425
      %v866 = vunpack.c.l.b16 %v426
      %v867 = vunpack.c.l.b16 %v427
      %v868 = vunpack.c.l.b16 %v428
      %v869 = vunpack.c.l.b16 %v429
      %v870 = vunpack.c.l.b16 %v430
      %v871 = vunpack.c.l.b16 %v431
      %v872 = vunpack.c.l.b16 %v432
      %v873 = vunpack.c.l.b16 %v433
      %v874 = vunpack.c.l.b16 %v434
      %v875 = vunpack.c.l.b16 %v435
      %v876 = vunpack.c.l.b16 %v436
      %v877 = vunpack.c.l.b16 %v437
      %v878 = vunpack.c.l.b16 %v438
      %v879 = vunpack.c.l.b16 %v439
      %v880 = vunpack.c.l.b16 %v440
      %v881 = vunpack.c.l.b16 %v441
      %v882 = vunpack.c.l.b16 %v442
      %v883 = vunpack.c.l.b16 %v443
      %v884 = vunpack.c.l.b16 %v444
      %v885 = vunpack.c.l.b16 %v445
      %v886 = vunpack.c.l.b16 %v446
      %v887 = vunpack.c.l.b16 %v447
      %v888 = vunpack.c.l.b16 %v448
      %v889 = vunpack.c.l.b16 %v449
      %v890 = vunpack.c.l.b16 %v450
      %v891 = vunpack.c.l.b16 %v451
      %v892 = vunpack.c.l.b16 %v452
      %v893 = vunpack.c.l.b16 %v453
      %v894 = vunpack.c.l.b16 %v454
      %v895 = vunpack.c.l.b16 %v455
      %v896 = vunpack.c.l.b16 %v456
      %v897 = vunpack.c.l.b16 %v457
      %v898 = vunpack.c.l.b16 %v458
      %v899 = vunpack.c.l.b16 %v459
      %v900 = vunpack.c.l.b16 %v460
      %v901 = vpack.c.b16 %v862, %v861
      %v902 = vpack.c.b16 %v864, %v863
      %v903 = vpack.c.b16 %v866, %v865
      %v904 = vpack.c.b16 %v868, %v867
      %v905 = vpack.c.b16 %v870, %v869
      %v906 = vpack.c.b16 %v872, %v871
      %v907 = vpack.c.b16 %v874, %v873
      %v908 = vpack.c.b16 %v876, %v875
      %v909 = vpack.c.b16 %v878, %v877
      %v910 = vpack.c.b16 %v880, %v879
      %v911 = vpack.c.b16 %v882, %v881
      %v912 = vpack.c.b16 %v884, %v883
      %v913 = vpack.c.b16 %v886, %v885
      %v914 = vpack.c.b16 %v888, %v887
      %v915 = vpack.c.b16 %v890, %v889
      %v916 = vpack.c.b16 %v892, %v891
      %v917 = vpack.c.b16 %v894, %v893
      %v918 = vpack.c.b16 %v896, %v895
      %v919 = vpack.c.b16 %v898, %v897
      %v920 = vpack.c.b16 %v900, %v899
      %vm941 = vcmask 523264
      %v943 = vsel %vm941, %v703, 0
      %v946 = vsel %vm941, %v706, 0
      %v949 = vsel %vm941, %v709, 0
      %v952 = vsel %vm941, %v712, 0
      %v955 = vsel %vm941, %v715, 0
      %v958 = vsel %vm941, %v718, 0
      %v961 = vsel %vm941, %v721, 0
      %v964 = vsel %vm941, %v724, 0
      %v967 = vsel %vm941, %v727, 0
      %v970 = vsel %vm941, %v730, 0
      %v973 = vsel %vm941, %v733, 0
      %v976 = vsel %vm941, %v736, 0
      %v979 = vsel %vm941, %v739, 0
      %v982 = vsel %vm941, %v742, 0
      %v985 = vsel %vm941, %v745, 0
      %v988 = vsel %vm941, %v748, 0
      %v991 = vsel %vm941, %v751, 0
      %v994 = vsel %vm941, %v754, 0
      %v997 = vsel %vm941, %v757, 0
      %v1000 = vsel %vm941, %v760, 0
      %v1003 = vsel %vm941, %v763, 0
      %v1006 = vsel %vm941, %v766, 0
      %v1009 = vsel %vm941, %v769, 0
      %v1012 = vsel %vm941, %v772, 0
      %1014 = vmatpush.bf16.msra.mxu0 %v908
      %1015 = vmatpush.bf16.msra.mxu0 %v907
      %1016 = vmatpush.bf16.msra.mxu0 %v906
      %1017 = vmatpush.bf16.msra.mxu0 %v905
      %1018 = vmatpush.bf16.msra.mxu0 %v904
      %1019 = vmatpush.bf16.msra.mxu0 %v903
      %1020 = vmatpush.bf16.msra.mxu0 %v902
      %1021 = vmatpush.bf16.msra.mxu0 %v901
      %1022 = vmatmul.bf16.gmra.mxu0 %v701
      %v1023 = vpop.f32.mrf.mxu0
      %v1024 = vadd.f32 0.0, %v1023
      %v1025 = vpop.f32.mrf.mxu0
      %v1026 = vadd.f32 0.0, %v1025
      %1027 = vmatmul.bf16.gmra.mxu0 %v704
      %v1028 = vpop.f32.mrf.mxu0
      %v1029 = vadd.f32 0.0, %v1028
      %v1030 = vpop.f32.mrf.mxu0
      %v1031 = vadd.f32 0.0, %v1030
      %1032 = vmatmul.bf16.gmra.mxu0 %v707
      %v1033 = vpop.f32.mrf.mxu0
      %v1034 = vadd.f32 0.0, %v1033
      %v1035 = vpop.f32.mrf.mxu0
      %v1036 = vadd.f32 0.0, %v1035
      %1037 = vmatmul.bf16.gmra.mxu0 %v710
      %v1038 = vpop.f32.mrf.mxu0
      %v1039 = vadd.f32 0.0, %v1038
      %v1040 = vpop.f32.mrf.mxu0
      %v1041 = vadd.f32 0.0, %v1040
      %1042 = vmatmul.bf16.gmra.mxu0 %v713
      %v1043 = vpop.f32.mrf.mxu0
      %v1044 = vadd.f32 0.0, %v1043
      %v1045 = vpop.f32.mrf.mxu0
      %v1046 = vadd.f32 0.0, %v1045
      %1047 = vmatmul.bf16.gmra.mxu0 %v716
      %v1048 = vpop.f32.mrf.mxu0
      %v1049 = vadd.f32 0.0, %v1048
      %v1050 = vpop.f32.mrf.mxu0
      %v1051 = vadd.f32 0.0, %v1050
      %1052 = vmatmul.bf16.gmra.mxu0 %v719
      %v1053 = vpop.f32.mrf.mxu0
      %v1054 = vadd.f32 0.0, %v1053
      %v1055 = vpop.f32.mrf.mxu0
      %v1056 = vadd.f32 0.0, %v1055
      %1057 = vmatmul.bf16.gmra.mxu0 %v722
      %v1058 = vpop.f32.mrf.mxu0
      %v1059 = vadd.f32 0.0, %v1058
      %v1060 = vpop.f32.mrf.mxu0
      %v1061 = vadd.f32 0.0, %v1060
      %1062 = vmatmul.bf16.gmra.mxu0 %v725
      %v1063 = vpop.f32.mrf.mxu0
      %v1064 = vadd.f32 0.0, %v1063
      %v1065 = vpop.f32.mrf.mxu0
      %v1066 = vadd.f32 0.0, %v1065
      %1067 = vmatmul.bf16.gmra.mxu0 %v728
      %v1068 = vpop.f32.mrf.mxu0
      %v1069 = vadd.f32 0.0, %v1068
      %v1070 = vpop.f32.mrf.mxu0
      %v1071 = vadd.f32 0.0, %v1070
      %1072 = vmatmul.bf16.gmra.mxu0 %v731
      %v1073 = vpop.f32.mrf.mxu0
      %v1074 = vadd.f32 0.0, %v1073
      %v1075 = vpop.f32.mrf.mxu0
      %v1076 = vadd.f32 0.0, %v1075
      %1077 = vmatmul.bf16.gmra.mxu0 %v734
      %v1078 = vpop.f32.mrf.mxu0
      %v1079 = vadd.f32 0.0, %v1078
      %v1080 = vpop.f32.mrf.mxu0
      %v1081 = vadd.f32 0.0, %v1080
      %1082 = vmatmul.bf16.gmra.mxu0 %v737
      %v1083 = vpop.f32.mrf.mxu0
      %v1084 = vadd.f32 0.0, %v1083
      %v1085 = vpop.f32.mrf.mxu0
      %v1086 = vadd.f32 0.0, %v1085
      %1087 = vmatmul.bf16.gmra.mxu0 %v740
      %v1088 = vpop.f32.mrf.mxu0
      %v1089 = vadd.f32 0.0, %v1088
      %v1090 = vpop.f32.mrf.mxu0
      %v1091 = vadd.f32 0.0, %v1090
      %1092 = vmatmul.bf16.gmra.mxu0 %v743
      %v1093 = vpop.f32.mrf.mxu0
      %v1094 = vadd.f32 0.0, %v1093
      %v1095 = vpop.f32.mrf.mxu0
      %v1096 = vadd.f32 0.0, %v1095
      %1097 = vmatmul.bf16.gmra.mxu0 %v746
      %v1098 = vpop.f32.mrf.mxu0
      %v1099 = vadd.f32 0.0, %v1098
      %v1100 = vpop.f32.mrf.mxu0
      %v1101 = vadd.f32 0.0, %v1100
      %1102 = vmatmul.bf16.gmra.mxu0 %v749
      %v1103 = vpop.f32.mrf.mxu0
      %v1104 = vadd.f32 0.0, %v1103
      %v1105 = vpop.f32.mrf.mxu0
      %v1106 = vadd.f32 0.0, %v1105
      %1107 = vmatmul.bf16.gmra.mxu0 %v752
      %v1108 = vpop.f32.mrf.mxu0
      %v1109 = vadd.f32 0.0, %v1108
      %v1110 = vpop.f32.mrf.mxu0
      %v1111 = vadd.f32 0.0, %v1110
      %1112 = vmatmul.bf16.gmra.mxu0 %v755
      %v1113 = vpop.f32.mrf.mxu0
      %v1114 = vadd.f32 0.0, %v1113
      %v1115 = vpop.f32.mrf.mxu0
      %v1116 = vadd.f32 0.0, %v1115
      %1117 = vmatmul.bf16.gmra.mxu0 %v758
      %v1118 = vpop.f32.mrf.mxu0
      %v1119 = vadd.f32 0.0, %v1118
      %v1120 = vpop.f32.mrf.mxu0
      %v1121 = vadd.f32 0.0, %v1120
      %1122 = vmatmul.bf16.gmra.mxu0 %v761
      %v1123 = vpop.f32.mrf.mxu0
      %v1124 = vadd.f32 0.0, %v1123
      %v1125 = vpop.f32.mrf.mxu0
      %v1126 = vadd.f32 0.0, %v1125
      %1127 = vmatmul.bf16.gmra.mxu0 %v764
      %v1128 = vpop.f32.mrf.mxu0
      %v1129 = vadd.f32 0.0, %v1128
      %v1130 = vpop.f32.mrf.mxu0
      %v1131 = vadd.f32 0.0, %v1130
      %1132 = vmatmul.bf16.gmra.mxu0 %v767
      %v1133 = vpop.f32.mrf.mxu0
      %v1134 = vadd.f32 0.0, %v1133
      %v1135 = vpop.f32.mrf.mxu0
      %v1136 = vadd.f32 0.0, %v1135
      %1137 = vmatmul.bf16.gmra.mxu0 %v770
      %v1138 = vpop.f32.mrf.mxu0
      %v1139 = vadd.f32 0.0, %v1138
      %v1140 = vpop.f32.mrf.mxu0
      %v1141 = vadd.f32 0.0, %v1140
      %1142 = vdwg.mxu0
      %1143 = vmatpush.bf16.msra.mxu0 %v916
      %1144 = vmatpush.bf16.msra.mxu0 %v915
      %1145 = vmatpush.bf16.msra.mxu0 %v914
      %1146 = vmatpush.bf16.msra.mxu0 %v913
      %1147 = vmatpush.bf16.msra.mxu0 %v912
      %1148 = vmatpush.bf16.msra.mxu0 %v911
      %1149 = vmatpush.bf16.msra.mxu0 %v910
      %1150 = vmatpush.bf16.msra.mxu0 %v909
      %1151 = vmatmul.bf16.gmra.mxu0 %v702
      %v1152 = vpop.f32.mrf.mxu0
      %v1153 = vadd.f32 %v1024, %v1152
      %v1154 = vpop.f32.mrf.mxu0
      %v1155 = vadd.f32 %v1026, %v1154
      %1156 = vmatmul.bf16.gmra.mxu0 %v705
      %v1157 = vpop.f32.mrf.mxu0
      %v1158 = vadd.f32 %v1029, %v1157
      %v1159 = vpop.f32.mrf.mxu0
      %v1160 = vadd.f32 %v1031, %v1159
      %1161 = vmatmul.bf16.gmra.mxu0 %v708
      %v1162 = vpop.f32.mrf.mxu0
      %v1163 = vadd.f32 %v1034, %v1162
      %v1164 = vpop.f32.mrf.mxu0
      %v1165 = vadd.f32 %v1036, %v1164
      %1166 = vmatmul.bf16.gmra.mxu0 %v711
      %v1167 = vpop.f32.mrf.mxu0
      %v1168 = vadd.f32 %v1039, %v1167
      %v1169 = vpop.f32.mrf.mxu0
      %v1170 = vadd.f32 %v1041, %v1169
      %1171 = vmatmul.bf16.gmra.mxu0 %v714
      %v1172 = vpop.f32.mrf.mxu0
      %v1173 = vadd.f32 %v1044, %v1172
      %v1174 = vpop.f32.mrf.mxu0
      %v1175 = vadd.f32 %v1046, %v1174
      %1176 = vmatmul.bf16.gmra.mxu0 %v717
      %v1177 = vpop.f32.mrf.mxu0
      %v1178 = vadd.f32 %v1049, %v1177
      %v1179 = vpop.f32.mrf.mxu0
      %v1180 = vadd.f32 %v1051, %v1179
      %1181 = vmatmul.bf16.gmra.mxu0 %v720
      %v1182 = vpop.f32.mrf.mxu0
      %v1183 = vadd.f32 %v1054, %v1182
      %v1184 = vpop.f32.mrf.mxu0
      %v1185 = vadd.f32 %v1056, %v1184
      %1186 = vmatmul.bf16.gmra.mxu0 %v723
      %v1187 = vpop.f32.mrf.mxu0
      %v1188 = vadd.f32 %v1059, %v1187
      %v1189 = vpop.f32.mrf.mxu0
      %v1190 = vadd.f32 %v1061, %v1189
      %1191 = vmatmul.bf16.gmra.mxu0 %v726
      %v1192 = vpop.f32.mrf.mxu0
      %v1193 = vadd.f32 %v1064, %v1192
      %v1194 = vpop.f32.mrf.mxu0
      %v1195 = vadd.f32 %v1066, %v1194
      %1196 = vmatmul.bf16.gmra.mxu0 %v729
      %v1197 = vpop.f32.mrf.mxu0
      %v1198 = vadd.f32 %v1069, %v1197
      %v1199 = vpop.f32.mrf.mxu0
      %v1200 = vadd.f32 %v1071, %v1199
      %1201 = vmatmul.bf16.gmra.mxu0 %v732
      %v1202 = vpop.f32.mrf.mxu0
      %v1203 = vadd.f32 %v1074, %v1202
      %v1204 = vpop.f32.mrf.mxu0
      %v1205 = vadd.f32 %v1076, %v1204
      %1206 = vmatmul.bf16.gmra.mxu0 %v735
      %v1207 = vpop.f32.mrf.mxu0
      %v1208 = vadd.f32 %v1079, %v1207
      %v1209 = vpop.f32.mrf.mxu0
      %v1210 = vadd.f32 %v1081, %v1209
      %1211 = vmatmul.bf16.gmra.mxu0 %v738
      %v1212 = vpop.f32.mrf.mxu0
      %v1213 = vadd.f32 %v1084, %v1212
      %v1214 = vpop.f32.mrf.mxu0
      %v1215 = vadd.f32 %v1086, %v1214
      %1216 = vmatmul.bf16.gmra.mxu0 %v741
      %v1217 = vpop.f32.mrf.mxu0
      %v1218 = vadd.f32 %v1089, %v1217
      %v1219 = vpop.f32.mrf.mxu0
      %v1220 = vadd.f32 %v1091, %v1219
      %1221 = vmatmul.bf16.gmra.mxu0 %v744
      %v1222 = vpop.f32.mrf.mxu0
      %v1223 = vadd.f32 %v1094, %v1222
      %v1224 = vpop.f32.mrf.mxu0
      %v1225 = vadd.f32 %v1096, %v1224
      %1226 = vmatmul.bf16.gmra.mxu0 %v747
      %v1227 = vpop.f32.mrf.mxu0
      %v1228 = vadd.f32 %v1099, %v1227
      %v1229 = vpop.f32.mrf.mxu0
      %v1230 = vadd.f32 %v1101, %v1229
      %1231 = vmatmul.bf16.gmra.mxu0 %v750
      %v1232 = vpop.f32.mrf.mxu0
      %v1233 = vadd.f32 %v1104, %v1232
      %v1234 = vpop.f32.mrf.mxu0
      %v1235 = vadd.f32 %v1106, %v1234
      %1236 = vmatmul.bf16.gmra.mxu0 %v753
      %v1237 = vpop.f32.mrf.mxu0
      %v1238 = vadd.f32 %v1109, %v1237
      %v1239 = vpop.f32.mrf.mxu0
      %v1240 = vadd.f32 %v1111, %v1239
      %1241 = vmatmul.bf16.gmra.mxu0 %v756
      %v1242 = vpop.f32.mrf.mxu0
      %v1243 = vadd.f32 %v1114, %v1242
      %v1244 = vpop.f32.mrf.mxu0
      %v1245 = vadd.f32 %v1116, %v1244
      %1246 = vmatmul.bf16.gmra.mxu0 %v759
      %v1247 = vpop.f32.mrf.mxu0
      %v1248 = vadd.f32 %v1119, %v1247
      %v1249 = vpop.f32.mrf.mxu0
      %v1250 = vadd.f32 %v1121, %v1249
      %1251 = vmatmul.bf16.gmra.mxu0 %v762
      %v1252 = vpop.f32.mrf.mxu0
      %v1253 = vadd.f32 %v1124, %v1252
      %v1254 = vpop.f32.mrf.mxu0
      %v1255 = vadd.f32 %v1126, %v1254
      %1256 = vmatmul.bf16.gmra.mxu0 %v765
      %v1257 = vpop.f32.mrf.mxu0
      %v1258 = vadd.f32 %v1129, %v1257
      %v1259 = vpop.f32.mrf.mxu0
      %v1260 = vadd.f32 %v1131, %v1259
      %1261 = vmatmul.bf16.gmra.mxu0 %v768
      %v1262 = vpop.f32.mrf.mxu0
      %v1263 = vadd.f32 %v1134, %v1262
      %v1264 = vpop.f32.mrf.mxu0
      %v1265 = vadd.f32 %v1136, %v1264
      %1266 = vmatmul.bf16.gmra.mxu0 %v771
      %v1267 = vpop.f32.mrf.mxu0
      %v1268 = vadd.f32 %v1139, %v1267
      %v1269 = vpop.f32.mrf.mxu0
      %v1270 = vadd.f32 %v1141, %v1269
      %1271 = vdwg.mxu0
      %1272 = vmatpush.bf16.msra.mxu0 0
      %1273 = vmatpush.bf16.msra.mxu0 0
      %1274 = vmatpush.bf16.msra.mxu0 0
      %1275 = vmatpush.bf16.msra.mxu0 0
      %1276 = vmatpush.bf16.msra.mxu0 %v920
      %1277 = vmatpush.bf16.msra.mxu0 %v919
      %1278 = vmatpush.bf16.msra.mxu0 %v918
      %1279 = vmatpush.bf16.msra.mxu0 %v917
      %1280 = vmatmul.bf16.gmra.mxu0 %v943
      %v1281 = vpop.f32.mrf.mxu0
      %v1282 = vadd.f32 %v1153, %v1281
      %v1283 = vpop.f32.mrf.mxu0
      %v1284 = vadd.f32 %v1155, %v1283
      %1285 = vmatmul.bf16.gmra.mxu0 %v946
      %v1286 = vpop.f32.mrf.mxu0
      %v1287 = vadd.f32 %v1158, %v1286
      %v1288 = vpop.f32.mrf.mxu0
      %v1289 = vadd.f32 %v1160, %v1288
      %1290 = vmatmul.bf16.gmra.mxu0 %v949
      %v1291 = vpop.f32.mrf.mxu0
      %v1292 = vadd.f32 %v1163, %v1291
      %v1293 = vpop.f32.mrf.mxu0
      %v1294 = vadd.f32 %v1165, %v1293
      %1295 = vmatmul.bf16.gmra.mxu0 %v952
      %v1296 = vpop.f32.mrf.mxu0
      %v1297 = vadd.f32 %v1168, %v1296
      %v1298 = vpop.f32.mrf.mxu0
      %v1299 = vadd.f32 %v1170, %v1298
      %1300 = vmatmul.bf16.gmra.mxu0 %v955
      %v1301 = vpop.f32.mrf.mxu0
      %v1302 = vadd.f32 %v1173, %v1301
      %v1303 = vpop.f32.mrf.mxu0
      %v1304 = vadd.f32 %v1175, %v1303
      %1305 = vmatmul.bf16.gmra.mxu0 %v958
      %v1306 = vpop.f32.mrf.mxu0
      %v1307 = vadd.f32 %v1178, %v1306
      %v1308 = vpop.f32.mrf.mxu0
      %v1309 = vadd.f32 %v1180, %v1308
      %1310 = vmatmul.bf16.gmra.mxu0 %v961
      %v1311 = vpop.f32.mrf.mxu0
      %v1312 = vadd.f32 %v1183, %v1311
      %v1313 = vpop.f32.mrf.mxu0
      %v1314 = vadd.f32 %v1185, %v1313
      %1315 = vmatmul.bf16.gmra.mxu0 %v964
      %v1316 = vpop.f32.mrf.mxu0
      %v1317 = vadd.f32 %v1188, %v1316
      %v1318 = vpop.f32.mrf.mxu0
      %v1319 = vadd.f32 %v1190, %v1318
      %1320 = vmatmul.bf16.gmra.mxu0 %v967
      %v1321 = vpop.f32.mrf.mxu0
      %v1322 = vadd.f32 %v1193, %v1321
      %v1323 = vpop.f32.mrf.mxu0
      %v1324 = vadd.f32 %v1195, %v1323
      %1325 = vmatmul.bf16.gmra.mxu0 %v970
      %v1326 = vpop.f32.mrf.mxu0
      %v1327 = vadd.f32 %v1198, %v1326
      %v1328 = vpop.f32.mrf.mxu0
      %v1329 = vadd.f32 %v1200, %v1328
      %1330 = vmatmul.bf16.gmra.mxu0 %v973
      %v1331 = vpop.f32.mrf.mxu0
      %v1332 = vadd.f32 %v1203, %v1331
      %v1333 = vpop.f32.mrf.mxu0
      %v1334 = vadd.f32 %v1205, %v1333
      %1335 = vmatmul.bf16.gmra.mxu0 %v976
      %v1336 = vpop.f32.mrf.mxu0
      %v1337 = vadd.f32 %v1208, %v1336
      %v1338 = vpop.f32.mrf.mxu0
      %v1339 = vadd.f32 %v1210, %v1338
      %1340 = vmatmul.bf16.gmra.mxu0 %v979
      %v1341 = vpop.f32.mrf.mxu0
      %v1342 = vadd.f32 %v1213, %v1341
      %v1343 = vpop.f32.mrf.mxu0
      %v1344 = vadd.f32 %v1215, %v1343
      %1345 = vmatmul.bf16.gmra.mxu0 %v982
      %v1346 = vpop.f32.mrf.mxu0
      %v1347 = vadd.f32 %v1218, %v1346
      %v1348 = vpop.f32.mrf.mxu0
      %v1349 = vadd.f32 %v1220, %v1348
      %1350 = vmatmul.bf16.gmra.mxu0 %v985
      %v1351 = vpop.f32.mrf.mxu0
      %v1352 = vadd.f32 %v1223, %v1351
      %v1353 = vpop.f32.mrf.mxu0
      %v1354 = vadd.f32 %v1225, %v1353
      %1355 = vmatmul.bf16.gmra.mxu0 %v988
      %v1356 = vpop.f32.mrf.mxu0
      %v1357 = vadd.f32 %v1228, %v1356
      %v1358 = vpop.f32.mrf.mxu0
      %v1359 = vadd.f32 %v1230, %v1358
      %1360 = vmatmul.bf16.gmra.mxu0 %v991
      %v1361 = vpop.f32.mrf.mxu0
      %v1362 = vadd.f32 %v1233, %v1361
      %v1363 = vpop.f32.mrf.mxu0
      %v1364 = vadd.f32 %v1235, %v1363
      %1365 = vmatmul.bf16.gmra.mxu0 %v994
      %v1366 = vpop.f32.mrf.mxu0
      %v1367 = vadd.f32 %v1238, %v1366
      %v1368 = vpop.f32.mrf.mxu0
      %v1369 = vadd.f32 %v1240, %v1368
      %1370 = vmatmul.bf16.gmra.mxu0 %v997
      %v1371 = vpop.f32.mrf.mxu0
      %v1372 = vadd.f32 %v1243, %v1371
      %v1373 = vpop.f32.mrf.mxu0
      %v1374 = vadd.f32 %v1245, %v1373
      %1375 = vmatmul.bf16.gmra.mxu0 %v1000
      %v1376 = vpop.f32.mrf.mxu0
      %v1377 = vadd.f32 %v1248, %v1376
      %v1378 = vpop.f32.mrf.mxu0
      %v1379 = vadd.f32 %v1250, %v1378
      %1380 = vmatmul.bf16.gmra.mxu0 %v1003
      %v1381 = vpop.f32.mrf.mxu0
      %v1382 = vadd.f32 %v1253, %v1381
      %v1383 = vpop.f32.mrf.mxu0
      %v1384 = vadd.f32 %v1255, %v1383
      %1385 = vmatmul.bf16.gmra.mxu0 %v1006
      %v1386 = vpop.f32.mrf.mxu0
      %v1387 = vadd.f32 %v1258, %v1386
      %v1388 = vpop.f32.mrf.mxu0
      %v1389 = vadd.f32 %v1260, %v1388
      %1390 = vmatmul.bf16.gmra.mxu0 %v1009
      %v1391 = vpop.f32.mrf.mxu0
      %v1392 = vadd.f32 %v1263, %v1391
      %v1393 = vpop.f32.mrf.mxu0
      %v1394 = vadd.f32 %v1265, %v1393
      %1395 = vmatmul.bf16.gmra.mxu0 %v1012
      %v1396 = vpop.f32.mrf.mxu0
      %v1397 = vadd.f32 %v1268, %v1396
      %v1398 = vpop.f32.mrf.mxu0
      %v1399 = vadd.f32 %v1270, %v1398
      %1400 = vdwg.mxu0
      %v1497 = vunpack.c.l.b16 %v187
      %v1498 = vunpack.c.h.b16 %v187
      %v1499 = vunpack.c.l.b16 %v188
      %v1500 = vunpack.c.l.b16 %v189
      %v1501 = vunpack.c.h.b16 %v189
      %v1502 = vunpack.c.l.b16 %v190
      %v1503 = vunpack.c.l.b16 %v191
      %v1504 = vunpack.c.h.b16 %v191
      %v1505 = vunpack.c.l.b16 %v192
      %v1506 = vunpack.c.l.b16 %v193
      %v1507 = vunpack.c.h.b16 %v193
      %v1508 = vunpack.c.l.b16 %v194
      %v1509 = vunpack.c.l.b16 %v195
      %v1510 = vunpack.c.h.b16 %v195
      %v1511 = vunpack.c.l.b16 %v196
      %v1512 = vunpack.c.l.b16 %v197
      %v1513 = vunpack.c.h.b16 %v197
      %v1514 = vunpack.c.l.b16 %v198
      %v1515 = vunpack.c.l.b16 %v199
      %v1516 = vunpack.c.h.b16 %v199
      %v1517 = vunpack.c.l.b16 %v200
      %v1518 = vunpack.c.l.b16 %v201
      %v1519 = vunpack.c.h.b16 %v201
      %v1520 = vunpack.c.l.b16 %v202
      %v1521 = vunpack.c.l.b16 %v203
      %v1522 = vunpack.c.h.b16 %v203
      %v1523 = vunpack.c.l.b16 %v204
      %v1524 = vunpack.c.l.b16 %v205
      %v1525 = vunpack.c.h.b16 %v205
      %v1526 = vunpack.c.l.b16 %v206
      %v1527 = vunpack.c.l.b16 %v207
      %v1528 = vunpack.c.h.b16 %v207
      %v1529 = vunpack.c.l.b16 %v208
      %v1530 = vunpack.c.l.b16 %v209
      %v1531 = vunpack.c.h.b16 %v209
      %v1532 = vunpack.c.l.b16 %v210
      %v1533 = vunpack.c.l.b16 %v211
      %v1534 = vunpack.c.h.b16 %v211
      %v1535 = vunpack.c.l.b16 %v212
      %v1536 = vunpack.c.l.b16 %v213
      %v1537 = vunpack.c.h.b16 %v213
      %v1538 = vunpack.c.l.b16 %v214
      %v1539 = vunpack.c.l.b16 %v215
      %v1540 = vunpack.c.h.b16 %v215
      %v1541 = vunpack.c.l.b16 %v216
      %v1542 = vunpack.c.l.b16 %v217
      %v1543 = vunpack.c.h.b16 %v217
      %v1544 = vunpack.c.l.b16 %v218
      %v1545 = vunpack.c.l.b16 %v219
      %v1546 = vunpack.c.h.b16 %v219
      %v1547 = vunpack.c.l.b16 %v220
      %v1548 = vunpack.c.l.b16 %v221
      %v1549 = vunpack.c.h.b16 %v221
      %v1550 = vunpack.c.l.b16 %v222
      %v1551 = vunpack.c.l.b16 %v223
      %v1552 = vunpack.c.h.b16 %v223
      %v1553 = vunpack.c.l.b16 %v224
      %v1554 = vunpack.c.l.b16 %v225
      %v1555 = vunpack.c.h.b16 %v225
      %v1556 = vunpack.c.l.b16 %v226
      %v1557 = vunpack.c.l.b16 %v227
      %v1558 = vunpack.c.h.b16 %v227
      %v1559 = vunpack.c.l.b16 %v228
      %v1560 = vunpack.c.l.b16 %v229
      %v1561 = vunpack.c.h.b16 %v229
      %v1562 = vunpack.c.l.b16 %v230
      %v1563 = vunpack.c.l.b16 %v231
      %v1564 = vunpack.c.h.b16 %v231
      %v1565 = vunpack.c.l.b16 %v232
      %v1566 = vunpack.c.l.b16 %v233
      %v1567 = vunpack.c.h.b16 %v233
      %v1568 = vunpack.c.l.b16 %v234
      %v1569 = vunpack.c.l.b16 %v235
      %v1570 = vunpack.c.h.b16 %v235
      %v1571 = vunpack.c.l.b16 %v236
      %v1572 = vunpack.c.l.b16 %v237
      %v1573 = vunpack.c.h.b16 %v237
      %v1574 = vunpack.c.l.b16 %v238
      %v1575 = vunpack.c.l.b16 %v239
      %v1576 = vunpack.c.h.b16 %v239
      %v1577 = vunpack.c.l.b16 %v240
      %v1578 = vunpack.c.l.b16 %v241
      %v1579 = vunpack.c.h.b16 %v241
      %v1580 = vunpack.c.l.b16 %v242
      %v1581 = vunpack.c.l.b16 %v243
      %v1582 = vunpack.c.h.b16 %v243
      %v1583 = vunpack.c.l.b16 %v244
      %v1584 = vunpack.c.l.b16 %v245
      %v1585 = vunpack.c.h.b16 %v245
      %v1586 = vunpack.c.l.b16 %v246
      %v1587 = vunpack.c.l.b16 %v247
      %v1588 = vunpack.c.h.b16 %v247
      %v1589 = vunpack.c.l.b16 %v248
      %v1590 = vunpack.c.l.b16 %v249
      %v1591 = vunpack.c.h.b16 %v249
      %v1592 = vunpack.c.l.b16 %v250
      %v1593 = vunpack.c.l.b16 %v251
      %v1594 = vunpack.c.h.b16 %v251
      %v1595 = vunpack.c.l.b16 %v252
      %v1596 = vunpack.c.l.b16 %v253
      %v1597 = vunpack.c.h.b16 %v253
      %v1598 = vunpack.c.l.b16 %v254
      %v1599 = vunpack.c.l.b16 %v255
      %v1600 = vunpack.c.h.b16 %v255
      %v1601 = vunpack.c.l.b16 %v256
      %v1602 = vunpack.c.l.b16 %v257
      %v1603 = vunpack.c.h.b16 %v257
      %v1604 = vunpack.c.l.b16 %v258
      %v1605 = vunpack.c.l.b16 %v259
      %v1606 = vunpack.c.h.b16 %v259
      %v1607 = vunpack.c.l.b16 %v260
      %v1608 = vunpack.c.l.b16 %v261
      %v1609 = vunpack.c.h.b16 %v261
      %v1610 = vunpack.c.l.b16 %v262
      %v1611 = vunpack.c.l.b16 %v263
      %v1612 = vunpack.c.h.b16 %v263
      %v1613 = vunpack.c.l.b16 %v264
      %v1614 = vunpack.c.l.b16 %v265
      %v1615 = vunpack.c.h.b16 %v265
      %v1616 = vunpack.c.l.b16 %v266
      %v1617 = vunpack.c.l.b16 %v267
      %v1618 = vunpack.c.h.b16 %v267
      %v1619 = vunpack.c.l.b16 %v268
      %v1620 = vunpack.c.l.b16 %v269
      %v1621 = vunpack.c.h.b16 %v269
      %v1622 = vunpack.c.l.b16 %v270
      %v1623 = vunpack.c.l.b16 %v271
      %v1624 = vunpack.c.h.b16 %v271
      %v1625 = vunpack.c.l.b16 %v272
      %v1626 = vunpack.c.l.b16 %v273
      %v1627 = vunpack.c.h.b16 %v273
      %v1628 = vunpack.c.l.b16 %v274
      %v1629 = vunpack.c.l.b16 %v275
      %v1630 = vunpack.c.h.b16 %v275
      %v1631 = vunpack.c.l.b16 %v276
      %v1632 = vunpack.c.l.b16 %v277
      %v1633 = vunpack.c.h.b16 %v277
      %v1634 = vunpack.c.l.b16 %v278
      %v1635 = vunpack.c.l.b16 %v279
      %v1636 = vunpack.c.h.b16 %v279
      %v1637 = vunpack.c.l.b16 %v280
      %v1638 = vunpack.c.l.b16 %v281
      %v1639 = vunpack.c.h.b16 %v281
      %v1640 = vunpack.c.l.b16 %v282
      %v1641 = vpack.c.b16 %v1500, %v1497
      %v1642 = vpack.c.b16 %v1501, %v1498
      %v1643 = vpack.c.b16 %v1502, %v1499
      %v1644 = vpack.c.b16 %v1506, %v1503
      %v1645 = vpack.c.b16 %v1507, %v1504
      %v1646 = vpack.c.b16 %v1508, %v1505
      %v1647 = vpack.c.b16 %v1512, %v1509
      %v1648 = vpack.c.b16 %v1513, %v1510
      %v1649 = vpack.c.b16 %v1514, %v1511
      %v1650 = vpack.c.b16 %v1518, %v1515
      %v1651 = vpack.c.b16 %v1519, %v1516
      %v1652 = vpack.c.b16 %v1520, %v1517
      %v1653 = vpack.c.b16 %v1524, %v1521
      %v1654 = vpack.c.b16 %v1525, %v1522
      %v1655 = vpack.c.b16 %v1526, %v1523
      %v1656 = vpack.c.b16 %v1530, %v1527
      %v1657 = vpack.c.b16 %v1531, %v1528
      %v1658 = vpack.c.b16 %v1532, %v1529
      %v1659 = vpack.c.b16 %v1536, %v1533
      %v1660 = vpack.c.b16 %v1537, %v1534
      %v1661 = vpack.c.b16 %v1538, %v1535
      %v1662 = vpack.c.b16 %v1542, %v1539
      %v1663 = vpack.c.b16 %v1543, %v1540
      %v1664 = vpack.c.b16 %v1544, %v1541
      %v1665 = vpack.c.b16 %v1548, %v1545
      %v1666 = vpack.c.b16 %v1549, %v1546
      %v1667 = vpack.c.b16 %v1550, %v1547
      %v1668 = vpack.c.b16 %v1554, %v1551
      %v1669 = vpack.c.b16 %v1555, %v1552
      %v1670 = vpack.c.b16 %v1556, %v1553
      %v1671 = vpack.c.b16 %v1560, %v1557
      %v1672 = vpack.c.b16 %v1561, %v1558
      %v1673 = vpack.c.b16 %v1562, %v1559
      %v1674 = vpack.c.b16 %v1566, %v1563
      %v1675 = vpack.c.b16 %v1567, %v1564
      %v1676 = vpack.c.b16 %v1568, %v1565
      %v1677 = vpack.c.b16 %v1572, %v1569
      %v1678 = vpack.c.b16 %v1573, %v1570
      %v1679 = vpack.c.b16 %v1574, %v1571
      %v1680 = vpack.c.b16 %v1578, %v1575
      %v1681 = vpack.c.b16 %v1579, %v1576
      %v1682 = vpack.c.b16 %v1580, %v1577
      %v1683 = vpack.c.b16 %v1584, %v1581
      %v1684 = vpack.c.b16 %v1585, %v1582
      %v1685 = vpack.c.b16 %v1586, %v1583
      %v1686 = vpack.c.b16 %v1590, %v1587
      %v1687 = vpack.c.b16 %v1591, %v1588
      %v1688 = vpack.c.b16 %v1592, %v1589
      %v1689 = vpack.c.b16 %v1596, %v1593
      %v1690 = vpack.c.b16 %v1597, %v1594
      %v1691 = vpack.c.b16 %v1598, %v1595
      %v1692 = vpack.c.b16 %v1602, %v1599
      %v1693 = vpack.c.b16 %v1603, %v1600
      %v1694 = vpack.c.b16 %v1604, %v1601
      %v1695 = vpack.c.b16 %v1608, %v1605
      %v1696 = vpack.c.b16 %v1609, %v1606
      %v1697 = vpack.c.b16 %v1610, %v1607
      %v1698 = vpack.c.b16 %v1614, %v1611
      %v1699 = vpack.c.b16 %v1615, %v1612
      %v1700 = vpack.c.b16 %v1616, %v1613
      %v1701 = vpack.c.b16 %v1620, %v1617
      %v1702 = vpack.c.b16 %v1621, %v1618
      %v1703 = vpack.c.b16 %v1622, %v1619
      %v1704 = vpack.c.b16 %v1626, %v1623
      %v1705 = vpack.c.b16 %v1627, %v1624
      %v1706 = vpack.c.b16 %v1628, %v1625
      %v1707 = vpack.c.b16 %v1632, %v1629
      %v1708 = vpack.c.b16 %v1633, %v1630
      %v1709 = vpack.c.b16 %v1634, %v1631
      %v1710 = vpack.c.b16 %v1638, %v1635
      %v1711 = vpack.c.b16 %v1639, %v1636
      %v1712 = vpack.c.b16 %v1640, %v1637
      %v1801 = vunpack.c.l.b16 %v283
      %v1802 = vunpack.c.l.b16 %v284
      %v1803 = vunpack.c.l.b16 %v285
      %v1804 = vunpack.c.l.b16 %v286
      %v1805 = vunpack.c.l.b16 %v287
      %v1806 = vunpack.c.l.b16 %v288
      %v1807 = vunpack.c.l.b16 %v289
      %v1808 = vunpack.c.l.b16 %v290
      %v1809 = vunpack.c.l.b16 %v291
      %v1810 = vunpack.c.l.b16 %v292
      %v1811 = vunpack.c.l.b16 %v293
      %v1812 = vunpack.c.l.b16 %v294
      %v1813 = vunpack.c.l.b16 %v295
      %v1814 = vunpack.c.l.b16 %v296
      %v1815 = vunpack.c.l.b16 %v297
      %v1816 = vunpack.c.l.b16 %v298
      %v1817 = vunpack.c.l.b16 %v299
      %v1818 = vunpack.c.l.b16 %v300
      %v1819 = vunpack.c.l.b16 %v301
      %v1820 = vunpack.c.l.b16 %v302
      %v1821 = vunpack.c.l.b16 %v303
      %v1822 = vunpack.c.l.b16 %v304
      %v1823 = vunpack.c.l.b16 %v305
      %v1824 = vunpack.c.l.b16 %v306
      %v1825 = vunpack.c.l.b16 %v307
      %v1826 = vunpack.c.l.b16 %v308
      %v1827 = vunpack.c.l.b16 %v309
      %v1828 = vunpack.c.l.b16 %v310
      %v1829 = vunpack.c.l.b16 %v311
      %v1830 = vunpack.c.l.b16 %v312
      %v1831 = vunpack.c.l.b16 %v313
      %v1832 = vunpack.c.l.b16 %v314
      %v1833 = vunpack.c.l.b16 %v315
      %v1834 = vunpack.c.l.b16 %v316
      %v1835 = vunpack.c.l.b16 %v317
      %v1836 = vunpack.c.l.b16 %v318
      %v1837 = vunpack.c.l.b16 %v319
      %v1838 = vunpack.c.l.b16 %v320
      %v1839 = vunpack.c.l.b16 %v321
      %v1840 = vunpack.c.l.b16 %v322
      %v1841 = vpack.c.b16 %v1802, %v1801
      %v1842 = vpack.c.b16 %v1804, %v1803
      %v1843 = vpack.c.b16 %v1806, %v1805
      %v1844 = vpack.c.b16 %v1808, %v1807
      %v1845 = vpack.c.b16 %v1810, %v1809
      %v1846 = vpack.c.b16 %v1812, %v1811
      %v1847 = vpack.c.b16 %v1814, %v1813
      %v1848 = vpack.c.b16 %v1816, %v1815
      %v1849 = vpack.c.b16 %v1818, %v1817
      %v1850 = vpack.c.b16 %v1820, %v1819
      %v1851 = vpack.c.b16 %v1822, %v1821
      %v1852 = vpack.c.b16 %v1824, %v1823
      %v1853 = vpack.c.b16 %v1826, %v1825
      %v1854 = vpack.c.b16 %v1828, %v1827
      %v1855 = vpack.c.b16 %v1830, %v1829
      %v1856 = vpack.c.b16 %v1832, %v1831
      %v1857 = vpack.c.b16 %v1834, %v1833
      %v1858 = vpack.c.b16 %v1836, %v1835
      %v1859 = vpack.c.b16 %v1838, %v1837
      %v1860 = vpack.c.b16 %v1840, %v1839
      %v1882 = vsel %vm941, %v1643, 0
      %v1885 = vsel %vm941, %v1646, 0
      %v1888 = vsel %vm941, %v1649, 0
      %v1891 = vsel %vm941, %v1652, 0
      %v1894 = vsel %vm941, %v1655, 0
      %v1897 = vsel %vm941, %v1658, 0
      %v1900 = vsel %vm941, %v1661, 0
      %v1903 = vsel %vm941, %v1664, 0
      %v1906 = vsel %vm941, %v1667, 0
      %v1909 = vsel %vm941, %v1670, 0
      %v1912 = vsel %vm941, %v1673, 0
      %v1915 = vsel %vm941, %v1676, 0
      %v1918 = vsel %vm941, %v1679, 0
      %v1921 = vsel %vm941, %v1682, 0
      %v1924 = vsel %vm941, %v1685, 0
      %v1927 = vsel %vm941, %v1688, 0
      %v1930 = vsel %vm941, %v1691, 0
      %v1933 = vsel %vm941, %v1694, 0
      %v1936 = vsel %vm941, %v1697, 0
      %v1939 = vsel %vm941, %v1700, 0
      %v1942 = vsel %vm941, %v1703, 0
      %v1945 = vsel %vm941, %v1706, 0
      %v1948 = vsel %vm941, %v1709, 0
      %v1951 = vsel %vm941, %v1712, 0
      %1953 = vmatpush.bf16.msra.mxu0 %v1848
      %1954 = vmatpush.bf16.msra.mxu0 %v1847
      %1955 = vmatpush.bf16.msra.mxu0 %v1846
      %1956 = vmatpush.bf16.msra.mxu0 %v1845
      %1957 = vmatpush.bf16.msra.mxu0 %v1844
      %1958 = vmatpush.bf16.msra.mxu0 %v1843
      %1959 = vmatpush.bf16.msra.mxu0 %v1842
      %1960 = vmatpush.bf16.msra.mxu0 %v1841
      %1961 = vmatmul.bf16.gmra.mxu0 %v1641
      %v1962 = vpop.f32.mrf.mxu0
      %v1963 = vadd.f32 %v1282, %v1962
      %v1964 = vpop.f32.mrf.mxu0
      %v1965 = vadd.f32 %v1284, %v1964
      %1966 = vmatmul.bf16.gmra.mxu0 %v1644
      %v1967 = vpop.f32.mrf.mxu0
      %v1968 = vadd.f32 %v1287, %v1967
      %v1969 = vpop.f32.mrf.mxu0
      %v1970 = vadd.f32 %v1289, %v1969
      %1971 = vmatmul.bf16.gmra.mxu0 %v1647
      %v1972 = vpop.f32.mrf.mxu0
      %v1973 = vadd.f32 %v1292, %v1972
      %v1974 = vpop.f32.mrf.mxu0
      %v1975 = vadd.f32 %v1294, %v1974
      %1976 = vmatmul.bf16.gmra.mxu0 %v1650
      %v1977 = vpop.f32.mrf.mxu0
      %v1978 = vadd.f32 %v1297, %v1977
      %v1979 = vpop.f32.mrf.mxu0
      %v1980 = vadd.f32 %v1299, %v1979
      %1981 = vmatmul.bf16.gmra.mxu0 %v1653
      %v1982 = vpop.f32.mrf.mxu0
      %v1983 = vadd.f32 %v1302, %v1982
      %v1984 = vpop.f32.mrf.mxu0
      %v1985 = vadd.f32 %v1304, %v1984
      %1986 = vmatmul.bf16.gmra.mxu0 %v1656
      %v1987 = vpop.f32.mrf.mxu0
      %v1988 = vadd.f32 %v1307, %v1987
      %v1989 = vpop.f32.mrf.mxu0
      %v1990 = vadd.f32 %v1309, %v1989
      %1991 = vmatmul.bf16.gmra.mxu0 %v1659
      %v1992 = vpop.f32.mrf.mxu0
      %v1993 = vadd.f32 %v1312, %v1992
      %v1994 = vpop.f32.mrf.mxu0
      %v1995 = vadd.f32 %v1314, %v1994
      %1996 = vmatmul.bf16.gmra.mxu0 %v1662
      %v1997 = vpop.f32.mrf.mxu0
      %v1998 = vadd.f32 %v1317, %v1997
      %v1999 = vpop.f32.mrf.mxu0
      %v2000 = vadd.f32 %v1319, %v1999
      %2001 = vmatmul.bf16.gmra.mxu0 %v1665
      %v2002 = vpop.f32.mrf.mxu0
      %v2003 = vadd.f32 %v1322, %v2002
      %v2004 = vpop.f32.mrf.mxu0
      %v2005 = vadd.f32 %v1324, %v2004
      %2006 = vmatmul.bf16.gmra.mxu0 %v1668
      %v2007 = vpop.f32.mrf.mxu0
      %v2008 = vadd.f32 %v1327, %v2007
      %v2009 = vpop.f32.mrf.mxu0
      %v2010 = vadd.f32 %v1329, %v2009
      %2011 = vmatmul.bf16.gmra.mxu0 %v1671
      %v2012 = vpop.f32.mrf.mxu0
      %v2013 = vadd.f32 %v1332, %v2012
      %v2014 = vpop.f32.mrf.mxu0
      %v2015 = vadd.f32 %v1334, %v2014
      %2016 = vmatmul.bf16.gmra.mxu0 %v1674
      %v2017 = vpop.f32.mrf.mxu0
      %v2018 = vadd.f32 %v1337, %v2017
      %v2019 = vpop.f32.mrf.mxu0
      %v2020 = vadd.f32 %v1339, %v2019
      %2021 = vmatmul.bf16.gmra.mxu0 %v1677
      %v2022 = vpop.f32.mrf.mxu0
      %v2023 = vadd.f32 %v1342, %v2022
      %v2024 = vpop.f32.mrf.mxu0
      %v2025 = vadd.f32 %v1344, %v2024
      %2026 = vmatmul.bf16.gmra.mxu0 %v1680
      %v2027 = vpop.f32.mrf.mxu0
      %v2028 = vadd.f32 %v1347, %v2027
      %v2029 = vpop.f32.mrf.mxu0
      %v2030 = vadd.f32 %v1349, %v2029
      %2031 = vmatmul.bf16.gmra.mxu0 %v1683
      %v2032 = vpop.f32.mrf.mxu0
      %v2033 = vadd.f32 %v1352, %v2032
      %v2034 = vpop.f32.mrf.mxu0
      %v2035 = vadd.f32 %v1354, %v2034
      %2036 = vmatmul.bf16.gmra.mxu0 %v1686
      %v2037 = vpop.f32.mrf.mxu0
      %v2038 = vadd.f32 %v1357, %v2037
      %v2039 = vpop.f32.mrf.mxu0
      %v2040 = vadd.f32 %v1359, %v2039
      %2041 = vmatmul.bf16.gmra.mxu0 %v1689
      %v2042 = vpop.f32.mrf.mxu0
      %v2043 = vadd.f32 %v1362, %v2042
      %v2044 = vpop.f32.mrf.mxu0
      %v2045 = vadd.f32 %v1364, %v2044
      %2046 = vmatmul.bf16.gmra.mxu0 %v1692
      %v2047 = vpop.f32.mrf.mxu0
      %v2048 = vadd.f32 %v1367, %v2047
      %v2049 = vpop.f32.mrf.mxu0
      %v2050 = vadd.f32 %v1369, %v2049
      %2051 = vmatmul.bf16.gmra.mxu0 %v1695
      %v2052 = vpop.f32.mrf.mxu0
      %v2053 = vadd.f32 %v1372, %v2052
      %v2054 = vpop.f32.mrf.mxu0
      %v2055 = vadd.f32 %v1374, %v2054
      %2056 = vmatmul.bf16.gmra.mxu0 %v1698
      %v2057 = vpop.f32.mrf.mxu0
      %v2058 = vadd.f32 %v1377, %v2057
      %v2059 = vpop.f32.mrf.mxu0
      %v2060 = vadd.f32 %v1379, %v2059
      %2061 = vmatmul.bf16.gmra.mxu0 %v1701
      %v2062 = vpop.f32.mrf.mxu0
      %v2063 = vadd.f32 %v1382, %v2062
      %v2064 = vpop.f32.mrf.mxu0
      %v2065 = vadd.f32 %v1384, %v2064
      %2066 = vmatmul.bf16.gmra.mxu0 %v1704
      %v2067 = vpop.f32.mrf.mxu0
      %v2068 = vadd.f32 %v1387, %v2067
      %v2069 = vpop.f32.mrf.mxu0
      %v2070 = vadd.f32 %v1389, %v2069
      %2071 = vmatmul.bf16.gmra.mxu0 %v1707
      %v2072 = vpop.f32.mrf.mxu0
      %v2073 = vadd.f32 %v1392, %v2072
      %v2074 = vpop.f32.mrf.mxu0
      %v2075 = vadd.f32 %v1394, %v2074
      %2076 = vmatmul.bf16.gmra.mxu0 %v1710
      %v2077 = vpop.f32.mrf.mxu0
      %v2078 = vadd.f32 %v1397, %v2077
      %v2079 = vpop.f32.mrf.mxu0
      %v2080 = vadd.f32 %v1399, %v2079
      %2081 = vdwg.mxu0
      %2082 = vmatpush.bf16.msra.mxu0 %v1856
      %2083 = vmatpush.bf16.msra.mxu0 %v1855
      %2084 = vmatpush.bf16.msra.mxu0 %v1854
      %2085 = vmatpush.bf16.msra.mxu0 %v1853
      %2086 = vmatpush.bf16.msra.mxu0 %v1852
      %2087 = vmatpush.bf16.msra.mxu0 %v1851
      %2088 = vmatpush.bf16.msra.mxu0 %v1850
      %2089 = vmatpush.bf16.msra.mxu0 %v1849
      %2090 = vmatmul.bf16.gmra.mxu0 %v1642
      %v2091 = vpop.f32.mrf.mxu0
      %v2092 = vadd.f32 %v1963, %v2091
      %v2093 = vpop.f32.mrf.mxu0
      %v2094 = vadd.f32 %v1965, %v2093
      %2095 = vmatmul.bf16.gmra.mxu0 %v1645
      %v2096 = vpop.f32.mrf.mxu0
      %v2097 = vadd.f32 %v1968, %v2096
      %v2098 = vpop.f32.mrf.mxu0
      %v2099 = vadd.f32 %v1970, %v2098
      %2100 = vmatmul.bf16.gmra.mxu0 %v1648
      %v2101 = vpop.f32.mrf.mxu0
      %v2102 = vadd.f32 %v1973, %v2101
      %v2103 = vpop.f32.mrf.mxu0
      %v2104 = vadd.f32 %v1975, %v2103
      %2105 = vmatmul.bf16.gmra.mxu0 %v1651
      %v2106 = vpop.f32.mrf.mxu0
      %v2107 = vadd.f32 %v1978, %v2106
      %v2108 = vpop.f32.mrf.mxu0
      %v2109 = vadd.f32 %v1980, %v2108
      %2110 = vmatmul.bf16.gmra.mxu0 %v1654
      %v2111 = vpop.f32.mrf.mxu0
      %v2112 = vadd.f32 %v1983, %v2111
      %v2113 = vpop.f32.mrf.mxu0
      %v2114 = vadd.f32 %v1985, %v2113
      %2115 = vmatmul.bf16.gmra.mxu0 %v1657
      %v2116 = vpop.f32.mrf.mxu0
      %v2117 = vadd.f32 %v1988, %v2116
      %v2118 = vpop.f32.mrf.mxu0
      %v2119 = vadd.f32 %v1990, %v2118
      %2120 = vmatmul.bf16.gmra.mxu0 %v1660
      %v2121 = vpop.f32.mrf.mxu0
      %v2122 = vadd.f32 %v1993, %v2121
      %v2123 = vpop.f32.mrf.mxu0
      %v2124 = vadd.f32 %v1995, %v2123
      %2125 = vmatmul.bf16.gmra.mxu0 %v1663
      %v2126 = vpop.f32.mrf.mxu0
      %v2127 = vadd.f32 %v1998, %v2126
      %v2128 = vpop.f32.mrf.mxu0
      %v2129 = vadd.f32 %v2000, %v2128
      %2130 = vmatmul.bf16.gmra.mxu0 %v1666
      %v2131 = vpop.f32.mrf.mxu0
      %v2132 = vadd.f32 %v2003, %v2131
      %v2133 = vpop.f32.mrf.mxu0
      %v2134 = vadd.f32 %v2005, %v2133
      %2135 = vmatmul.bf16.gmra.mxu0 %v1669
      %v2136 = vpop.f32.mrf.mxu0
      %v2137 = vadd.f32 %v2008, %v2136
      %v2138 = vpop.f32.mrf.mxu0
      %v2139 = vadd.f32 %v2010, %v2138
      %2140 = vmatmul.bf16.gmra.mxu0 %v1672
      %v2141 = vpop.f32.mrf.mxu0
      %v2142 = vadd.f32 %v2013, %v2141
      %v2143 = vpop.f32.mrf.mxu0
      %v2144 = vadd.f32 %v2015, %v2143
      %2145 = vmatmul.bf16.gmra.mxu0 %v1675
      %v2146 = vpop.f32.mrf.mxu0
      %v2147 = vadd.f32 %v2018, %v2146
      %v2148 = vpop.f32.mrf.mxu0
      %v2149 = vadd.f32 %v2020, %v2148
      %2150 = vmatmul.bf16.gmra.mxu0 %v1678
      %v2151 = vpop.f32.mrf.mxu0
      %v2152 = vadd.f32 %v2023, %v2151
      %v2153 = vpop.f32.mrf.mxu0
      %v2154 = vadd.f32 %v2025, %v2153
      %2155 = vmatmul.bf16.gmra.mxu0 %v1681
      %v2156 = vpop.f32.mrf.mxu0
      %v2157 = vadd.f32 %v2028, %v2156
      %v2158 = vpop.f32.mrf.mxu0
      %v2159 = vadd.f32 %v2030, %v2158
      %2160 = vmatmul.bf16.gmra.mxu0 %v1684
      %v2161 = vpop.f32.mrf.mxu0
      %v2162 = vadd.f32 %v2033, %v2161
      %v2163 = vpop.f32.mrf.mxu0
      %v2164 = vadd.f32 %v2035, %v2163
      %2165 = vmatmul.bf16.gmra.mxu0 %v1687
      %v2166 = vpop.f32.mrf.mxu0
      %v2167 = vadd.f32 %v2038, %v2166
      %v2168 = vpop.f32.mrf.mxu0
      %v2169 = vadd.f32 %v2040, %v2168
      %2170 = vmatmul.bf16.gmra.mxu0 %v1690
      %v2171 = vpop.f32.mrf.mxu0
      %v2172 = vadd.f32 %v2043, %v2171
      %v2173 = vpop.f32.mrf.mxu0
      %v2174 = vadd.f32 %v2045, %v2173
      %2175 = vmatmul.bf16.gmra.mxu0 %v1693
      %v2176 = vpop.f32.mrf.mxu0
      %v2177 = vadd.f32 %v2048, %v2176
      %v2178 = vpop.f32.mrf.mxu0
      %v2179 = vadd.f32 %v2050, %v2178
      %2180 = vmatmul.bf16.gmra.mxu0 %v1696
      %v2181 = vpop.f32.mrf.mxu0
      %v2182 = vadd.f32 %v2053, %v2181
      %v2183 = vpop.f32.mrf.mxu0
      %v2184 = vadd.f32 %v2055, %v2183
      %2185 = vmatmul.bf16.gmra.mxu0 %v1699
      %v2186 = vpop.f32.mrf.mxu0
      %v2187 = vadd.f32 %v2058, %v2186
      %v2188 = vpop.f32.mrf.mxu0
      %v2189 = vadd.f32 %v2060, %v2188
      %2190 = vmatmul.bf16.gmra.mxu0 %v1702
      %v2191 = vpop.f32.mrf.mxu0
      %v2192 = vadd.f32 %v2063, %v2191
      %v2193 = vpop.f32.mrf.mxu0
      %v2194 = vadd.f32 %v2065, %v2193
      %2195 = vmatmul.bf16.gmra.mxu0 %v1705
      %v2196 = vpop.f32.mrf.mxu0
      %v2197 = vadd.f32 %v2068, %v2196
      %v2198 = vpop.f32.mrf.mxu0
      %v2199 = vadd.f32 %v2070, %v2198
      %2200 = vmatmul.bf16.gmra.mxu0 %v1708
      %v2201 = vpop.f32.mrf.mxu0
      %v2202 = vadd.f32 %v2073, %v2201
      %v2203 = vpop.f32.mrf.mxu0
      %v2204 = vadd.f32 %v2075, %v2203
      %2205 = vmatmul.bf16.gmra.mxu0 %v1711
      %v2206 = vpop.f32.mrf.mxu0
      %v2207 = vadd.f32 %v2078, %v2206
      %v2208 = vpop.f32.mrf.mxu0
      %v2209 = vadd.f32 %v2080, %v2208
      %2210 = vdwg.mxu0
      %2211 = vmatpush.bf16.msra.mxu0 0
      %2212 = vmatpush.bf16.msra.mxu0 0
      %2213 = vmatpush.bf16.msra.mxu0 0
      %2214 = vmatpush.bf16.msra.mxu0 0
      %2215 = vmatpush.bf16.msra.mxu0 %v1860
      %2216 = vmatpush.bf16.msra.mxu0 %v1859
      %2217 = vmatpush.bf16.msra.mxu0 %v1858
      %2218 = vmatpush.bf16.msra.mxu0 %v1857
      %2219 = vmatmul.bf16.gmra.mxu0 %v1882
      %v2220 = vpop.f32.mrf.mxu0
      %v2221 = vadd.f32 %v2092, %v2220
      %v2222 = vpop.f32.mrf.mxu0
      %v2223 = vadd.f32 %v2094, %v2222
      %2224 = vmatmul.bf16.gmra.mxu0 %v1885
      %v2225 = vpop.f32.mrf.mxu0
      %v2226 = vadd.f32 %v2097, %v2225
      %v2227 = vpop.f32.mrf.mxu0
      %v2228 = vadd.f32 %v2099, %v2227
      %2229 = vmatmul.bf16.gmra.mxu0 %v1888
      %v2230 = vpop.f32.mrf.mxu0
      %v2231 = vadd.f32 %v2102, %v2230
      %v2232 = vpop.f32.mrf.mxu0
      %v2233 = vadd.f32 %v2104, %v2232
      %2234 = vmatmul.bf16.gmra.mxu0 %v1891
      %v2235 = vpop.f32.mrf.mxu0
      %v2236 = vadd.f32 %v2107, %v2235
      %v2237 = vpop.f32.mrf.mxu0
      %v2238 = vadd.f32 %v2109, %v2237
      %2239 = vmatmul.bf16.gmra.mxu0 %v1894
      %v2240 = vpop.f32.mrf.mxu0
      %v2241 = vadd.f32 %v2112, %v2240
      %v2242 = vpop.f32.mrf.mxu0
      %v2243 = vadd.f32 %v2114, %v2242
      %2244 = vmatmul.bf16.gmra.mxu0 %v1897
      %v2245 = vpop.f32.mrf.mxu0
      %v2246 = vadd.f32 %v2117, %v2245
      %v2247 = vpop.f32.mrf.mxu0
      %v2248 = vadd.f32 %v2119, %v2247
      %2249 = vmatmul.bf16.gmra.mxu0 %v1900
      %v2250 = vpop.f32.mrf.mxu0
      %v2251 = vadd.f32 %v2122, %v2250
      %v2252 = vpop.f32.mrf.mxu0
      %v2253 = vadd.f32 %v2124, %v2252
      %2254 = vmatmul.bf16.gmra.mxu0 %v1903
      %v2255 = vpop.f32.mrf.mxu0
      %v2256 = vadd.f32 %v2127, %v2255
      %v2257 = vpop.f32.mrf.mxu0
      %v2258 = vadd.f32 %v2129, %v2257
      %2259 = vmatmul.bf16.gmra.mxu0 %v1906
      %v2260 = vpop.f32.mrf.mxu0
      %v2261 = vadd.f32 %v2132, %v2260
      %v2262 = vpop.f32.mrf.mxu0
      %v2263 = vadd.f32 %v2134, %v2262
      %2264 = vmatmul.bf16.gmra.mxu0 %v1909
      %v2265 = vpop.f32.mrf.mxu0
      %v2266 = vadd.f32 %v2137, %v2265
      %v2267 = vpop.f32.mrf.mxu0
      %v2268 = vadd.f32 %v2139, %v2267
      %2269 = vmatmul.bf16.gmra.mxu0 %v1912
      %v2270 = vpop.f32.mrf.mxu0
      %v2271 = vadd.f32 %v2142, %v2270
      %v2272 = vpop.f32.mrf.mxu0
      %v2273 = vadd.f32 %v2144, %v2272
      %2274 = vmatmul.bf16.gmra.mxu0 %v1915
      %v2275 = vpop.f32.mrf.mxu0
      %v2276 = vadd.f32 %v2147, %v2275
      %v2277 = vpop.f32.mrf.mxu0
      %v2278 = vadd.f32 %v2149, %v2277
      %2279 = vmatmul.bf16.gmra.mxu0 %v1918
      %v2280 = vpop.f32.mrf.mxu0
      %v2281 = vadd.f32 %v2152, %v2280
      %v2282 = vpop.f32.mrf.mxu0
      %v2283 = vadd.f32 %v2154, %v2282
      %2284 = vmatmul.bf16.gmra.mxu0 %v1921
      %v2285 = vpop.f32.mrf.mxu0
      %v2286 = vadd.f32 %v2157, %v2285
      %v2287 = vpop.f32.mrf.mxu0
      %v2288 = vadd.f32 %v2159, %v2287
      %2289 = vmatmul.bf16.gmra.mxu0 %v1924
      %v2290 = vpop.f32.mrf.mxu0
      %v2291 = vadd.f32 %v2162, %v2290
      %v2292 = vpop.f32.mrf.mxu0
      %v2293 = vadd.f32 %v2164, %v2292
      %2294 = vmatmul.bf16.gmra.mxu0 %v1927
      %v2295 = vpop.f32.mrf.mxu0
      %v2296 = vadd.f32 %v2167, %v2295
      %v2297 = vpop.f32.mrf.mxu0
      %v2298 = vadd.f32 %v2169, %v2297
      %2299 = vmatmul.bf16.gmra.mxu0 %v1930
      %v2300 = vpop.f32.mrf.mxu0
      %v2301 = vadd.f32 %v2172, %v2300
      %v2302 = vpop.f32.mrf.mxu0
      %v2303 = vadd.f32 %v2174, %v2302
      %2304 = vmatmul.bf16.gmra.mxu0 %v1933
      %v2305 = vpop.f32.mrf.mxu0
      %v2306 = vadd.f32 %v2177, %v2305
      %v2307 = vpop.f32.mrf.mxu0
      %v2308 = vadd.f32 %v2179, %v2307
      %2309 = vmatmul.bf16.gmra.mxu0 %v1936
      %v2310 = vpop.f32.mrf.mxu0
      %v2311 = vadd.f32 %v2182, %v2310
      %v2312 = vpop.f32.mrf.mxu0
      %v2313 = vadd.f32 %v2184, %v2312
      %2314 = vmatmul.bf16.gmra.mxu0 %v1939
      %v2315 = vpop.f32.mrf.mxu0
      %v2316 = vadd.f32 %v2187, %v2315
      %v2317 = vpop.f32.mrf.mxu0
      %v2318 = vadd.f32 %v2189, %v2317
      %2319 = vmatmul.bf16.gmra.mxu0 %v1942
      %v2320 = vpop.f32.mrf.mxu0
      %v2321 = vadd.f32 %v2192, %v2320
      %v2322 = vpop.f32.mrf.mxu0
      %v2323 = vadd.f32 %v2194, %v2322
      %2324 = vmatmul.bf16.gmra.mxu0 %v1945
      %v2325 = vpop.f32.mrf.mxu0
      %v2326 = vadd.f32 %v2197, %v2325
      %v2327 = vpop.f32.mrf.mxu0
      %v2328 = vadd.f32 %v2199, %v2327
      %2329 = vmatmul.bf16.gmra.mxu0 %v1948
      %v2330 = vpop.f32.mrf.mxu0
      %v2331 = vadd.f32 %v2202, %v2330
      %v2332 = vpop.f32.mrf.mxu0
      %v2333 = vadd.f32 %v2204, %v2332
      %2334 = vmatmul.bf16.gmra.mxu0 %v1951
      %v2335 = vpop.f32.mrf.mxu0
      %v2336 = vadd.f32 %v2207, %v2335
      %v2337 = vpop.f32.mrf.mxu0
      %v2338 = vadd.f32 %v2209, %v2337
      %2339 = vdwg.mxu0
      %vm2340 = vcmask 64512
      %2341 = vst.msk [vmem:[%s184] sm:$0xff] %vm2340, %v2221
      %2342 = vst.msk [vmem:[%s184 + $0x8] sm:$0xff] %vm2340, %v2223
      %2343 = vst.msk [vmem:[%s184 + $0x10] sm:$0xff] %vm2340, %v2226
      %2344 = vst.msk [vmem:[%s184 + $0x18] sm:$0xff] %vm2340, %v2228
      %2345 = vst.msk [vmem:[%s184 + $0x20] sm:$0xff] %vm2340, %v2231
      %2346 = vst.msk [vmem:[%s184 + $0x28] sm:$0xff] %vm2340, %v2233
      %2347 = vst.msk [vmem:[%s184 + $0x30] sm:$0xff] %vm2340, %v2236
      %2348 = vst.msk [vmem:[%s184 + $0x38] sm:$0xff] %vm2340, %v2238
      %2349 = vst.msk [vmem:[%s184 + $0x40] sm:$0xff] %vm2340, %v2241
      %2350 = vst.msk [vmem:[%s184 + $0x48] sm:$0xff] %vm2340, %v2243
      %2351 = vst.msk [vmem:[%s184 + $0x50] sm:$0xff] %vm2340, %v2246
      %2352 = vst.msk [vmem:[%s184 + $0x58] sm:$0xff] %vm2340, %v2248
      %2353 = vst.msk [vmem:[%s184 + $0x60] sm:$0xff] %vm2340, %v2251
      %2354 = vst.msk [vmem:[%s184 + $0x68] sm:$0xff] %vm2340, %v2253
      %2355 = vst.msk [vmem:[%s184 + $0x70] sm:$0xff] %vm2340, %v2256
      %2356 = vst.msk [vmem:[%s184 + $0x78] sm:$0xff] %vm2340, %v2258
      %2357 = vst.msk [vmem:[%s184 + $0x80] sm:$0xff] %vm2340, %v2261
      %2358 = vst.msk [vmem:[%s184 + $0x88] sm:$0xff] %vm2340, %v2263
      %2359 = vst.msk [vmem:[%s184 + $0x90] sm:$0xff] %vm2340, %v2266
      %2360 = vst.msk [vmem:[%s184 + $0x98] sm:$0xff] %vm2340, %v2268
      %2361 = vst.msk [vmem:[%s184 + $0xa0] sm:$0xff] %vm2340, %v2271
      %2362 = vst.msk [vmem:[%s184 + $0xa8] sm:$0xff] %vm2340, %v2273
      %2363 = vst.msk [vmem:[%s184 + $0xb0] sm:$0xff] %vm2340, %v2276
      %2364 = vst.msk [vmem:[%s184 + $0xb8] sm:$0xff] %vm2340, %v2278
      %2365 = vst.msk [vmem:[%s184 + $0xc0] sm:$0xff] %vm2340, %v2281
      %2366 = vst.msk [vmem:[%s184 + $0xc8] sm:$0xff] %vm2340, %v2283
      %2367 = vst.msk [vmem:[%s184 + $0xd0] sm:$0xff] %vm2340, %v2286
      %2368 = vst.msk [vmem:[%s184 + $0xd8] sm:$0xff] %vm2340, %v2288
      %2369 = vst.msk [vmem:[%s184 + $0xe0] sm:$0xff] %vm2340, %v2291
      %2370 = vst.msk [vmem:[%s184 + $0xe8] sm:$0xff] %vm2340, %v2293
      %2371 = vst.msk [vmem:[%s184 + $0xf0] sm:$0xff] %vm2340, %v2296
      %2372 = vst.msk [vmem:[%s184 + $0xf8] sm:$0xff] %vm2340, %v2298
      %2373 = vst.msk [vmem:[%s184 + $0x100] sm:$0xff] %vm2340, %v2301
      %2374 = vst.msk [vmem:[%s184 + $0x108] sm:$0xff] %vm2340, %v2303
      %2375 = vst.msk [vmem:[%s184 + $0x110] sm:$0xff] %vm2340, %v2306
      %2376 = vst.msk [vmem:[%s184 + $0x118] sm:$0xff] %vm2340, %v2308
      %2377 = vst.msk [vmem:[%s184 + $0x120] sm:$0xff] %vm2340, %v2311
      %2378 = vst.msk [vmem:[%s184 + $0x128] sm:$0xff] %vm2340, %v2313
      %2379 = vst.msk [vmem:[%s184 + $0x130] sm:$0xff] %vm2340, %v2316
      %2380 = vst.msk [vmem:[%s184 + $0x138] sm:$0xff] %vm2340, %v2318
      %2381 = vst.msk [vmem:[%s184 + $0x140] sm:$0xff] %vm2340, %v2321
      %2382 = vst.msk [vmem:[%s184 + $0x148] sm:$0xff] %vm2340, %v2323
      %2383 = vst.msk [vmem:[%s184 + $0x150] sm:$0xff] %vm2340, %v2326
      %2384 = vst.msk [vmem:[%s184 + $0x158] sm:$0xff] %vm2340, %v2328
      %2385 = vst.msk [vmem:[%s184 + $0x160] sm:$0xff] %vm2340, %v2331
      %2386 = vst.msk [vmem:[%s184 + $0x168] sm:$0xff] %vm2340, %v2333
      %2387 = vst.msk [vmem:[%s184 + $0x170] sm:$0xff] %vm2340, %v2336
      %2388 = vst.msk [vmem:[%s184 + $0x178] sm:$0xff] %vm2340, %v2338
      %s2389 = smul.u32 48, %s18
      %p2390 = scmp.lt.s32.totalorder %s17, 1
      %s2391 = scalar_select %p2390, %s17, 1
      %p2392 = scmp.lt.s32.totalorder %s2389, 47
      %s2393 = scalar_select %p2392, %s2389, 47
      %s2394 = smul.addr %s2391, 48
      %s2395 = sadd.s32 %s2393, %s2394
      %s2396 = smul.addr %s2395, 8
      %s2397 = scalar_lea.vmem %s2, %s2396
      // Predicated region
      $region29: #{tpu_custom_call.1} parent=27 // pred_check
        %p2398 = pneg %p94
      $region30: #{tpu_custom_call.1} parent=27 // pred_check_branch
        %2400 = sbr.rel (%p2398) target = $region32
      $region31: #{tpu_custom_call.1} parent=27 // pred_region
        %s2401 = smul.u32 48, %s18
      $region32: #{tpu_custom_call.1} parent=27 // pred_fallthru
        _
    $region28: #{tpu_custom_call.1} parent=5 // pred_fallthru
      _
    %p2402 = scmp.le.s32.totalorder 2, %s8
    // Predicated region
    $region33: #{tpu_custom_call.1} parent=5 // pred_check
      %p2403 = pneg %p2402
    $region34: #{tpu_custom_call.1} parent=5 // pred_check_branch
      %2405 = sbr.rel (%p2403) target = $region36
    $region35: #{tpu_custom_call.1} parent=5 // pred_region
      %s2406 = ssub.s32 %s8, 2
      // Predicated region
      $region37: #{tpu_custom_call.1} parent=35 // pred_check
        %p2407 = pneg %p100
      $region38: #{tpu_custom_call.1} parent=35 // pred_check_branch
        %2409 = sbr.rel (%p2407) target = $region40
      $region39: #{tpu_custom_call.1} parent=35 // pred_region
        %s2410 = smul.u32 48, %s20
        %p2411 = scmp.lt.s32.totalorder %s19, 1
        %s2412 = scalar_select %p2411, %s19, 1
        %p2413 = scmp.lt.s32.totalorder %s2410, 47
        %s2414 = scalar_select %p2413, %s2410, 47
        %s2415 = smul.addr %s2412, 48
        %s2416 = sadd.s32 %s2414, %s2415
        %s2417 = smul.addr %s2416, 8
        %s2418 = scalar_lea.vmem %s2, %s2417
      $region40: #{tpu_custom_call.1} parent=35 // pred_fallthru
        _
    $region36: #{tpu_custom_call.1} parent=5 // pred_fallthru
      _
  $region6: #{tpu_custom_call.1} parent=0 // loop_footer
    %s12 = sadd.s32 1, %s8
  $region7: #{tpu_custom_call.1} parent=0 // loop_footer_branch
    %7 = sbr.rel target = $region3
  $region8: #{tpu_custom_call.1} parent=0 // loop_exit
    _

</llo_original>
